<compile_context>
chip_gen: v7x
topology: tpu7x:2x2x1
jax: 0.10.0
libtpu: 0.0.40
codegen_flags: <defaults>
</compile_context>

<pallas_src>
import functools

import jax
import jax.numpy as jnp
from jax.experimental import pallas as pl
from jax.experimental.pallas import tpu as pltpu

BN_EPS = 1e-5
LANE = 128


def _round_up(x, m):
    return ((x + m - 1) // m) * m


# ----------------------------------------------------------------------------
# Fused kernel: dw 3x3 (dilated) + shift1 + ReLU + pw 1x1 + shift2 + ReLU
# ----------------------------------------------------------------------------
def _block_fused_kernel(x_ref, wdw_ref, sh1_ref, wpw_ref, sh2_ref, o_ref, *,
                        H, W, dilation, cin, use_mxu):
    # x_ref:   (1, Hp, Wp, Cin)    spatially zero-padded image (one batch elem)
    # wdw_ref: (3, 3, Cin)         depthwise weights, BN1 scale folded in
    # sh1_ref: (1, Cin)            BN1 shift
    # wpw_ref: (Cin, Cout_pad)     pointwise weights, BN2 scale folded in,
    #                              Cout zero-padded to a multiple of 128
    # sh2_ref: (1, Cout_pad)       BN2 shift, zero-padded
    # o_ref:   (1, H, W, Cout_pad) lane-dense output block
    cout_p = o_ref.shape[-1]

    # ---- depthwise 3x3 (dilated, stride 1): 9 shifted VPU MACs, f32 acc ----
    wdw = wdw_ref[...].astype(jnp.float32)            # hoisted out of tap loop
    y = None
    for kh in range(3):
        for kw in range(3):
            xs = x_ref[0,
                       kh * dilation: kh * dilation + H,
                       kw * dilation: kw * dilation + W, :].astype(jnp.float32)
            t = xs * wdw[kh, kw, :]
            y = t if y is None else y + t
    # BN1 (scale already folded into wdw) + ReLU
    y = jnp.maximum(y + sh1_ref[0, :].astype(jnp.float32), 0.0)   # (H, W, Cin)

    # ---- pointwise 1x1 + BN2 shift + ReLU, straight out of registers ----
    wpw = wpw_ref[...].astype(jnp.float32)                        # (Cin, Cout_pad)
    if use_mxu:
        # Larger Cin: proper MXU matmul with a 128-multiple N dimension.
        acc = jnp.dot(y.reshape(H * W, cin), wpw,
                      preferred_element_type=jnp.float32)
        acc = acc.reshape(H, W, cout_p)
    else:
        # Tiny Cin (e.g. 3): sum of outer products on the VPU — the MXU would
        # be >98% idle at K=3 and only pay push/pop latency.
        acc = None
        for c in range(cin):
            t = y[:, :, c:c + 1] * wpw[c, :]
            acc = t if acc is None else acc + t
    out = jnp.maximum(acc + sh2_ref[0, :].astype(jnp.float32), 0.0)
    o_ref[0, :, :, :] = out.astype(o_ref.dtype)


def block_fused(x_nhwc, fp, dilation):
    """One Block_mobilenet forward (inference BN), fused in a single pallas_call.

    x_nhwc: (N, H, W, Cin).  Returns (N, H, W, Cout_pad) with Cout_pad a
    multiple of 128; channels >= fp['cout'] are exactly zero.
    """
    N, H, W, Cin = x_nhwc.shape
    Cout_pad = fp["w_pw_s"].shape[1]
    pad = dilation
    # Halo pad of the input only (smallest tensor in the block); the
    # intermediate activation and the padded-M round trips are gone.
    xp = jnp.pad(x_nhwc, ((0, 0), (pad, pad), (pad, pad), (0, 0)))
    Hp, Wp = H + 2 * pad, W + 2 * pad

    kernel = functools.partial(_block_fused_kernel, H=H, W=W,
                               dilation=dilation, cin=Cin,
                               use_mxu=Cin >= 16)
    return pl.pallas_call(
        kernel,
        out_shape=jax.ShapeDtypeStruct((N, H, W, Cout_pad), x_nhwc.dtype),
        grid=(N,),                       # N=2 -> even parallel axis (v7x 2 TCs)
        in_specs=[
            pl.BlockSpec((1, Hp, Wp, Cin), lambda n: (n, 0, 0, 0)),
            pl.BlockSpec((3, 3, Cin), lambda n: (0, 0, 0)),
            pl.BlockSpec((1, Cin), lambda n: (0, 0)),
            pl.BlockSpec((Cin, Cout_pad), lambda n: (0, 0)),
            pl.BlockSpec((1, Cout_pad), lambda n: (0, 0)),
        ],
        out_specs=pl.BlockSpec((1, H, W, Cout_pad), lambda n: (n, 0, 0, 0)),
        compiler_params=pltpu.CompilerParams(
            dimension_semantics=("parallel",),
            vmem_limit_bytes=32 * 1024 * 1024),   # safe on v5e/v6e/v7x
    )(xp, fp["w_dw_s"], fp["shift1"], fp["w_pw_s"], fp["shift2"])


# ----------------------------------------------------------------------------
# Parameter construction (deterministic; shapes from the PyTorch __init__).
# Raw params are kept for the reference path; folded/padded params feed the
# Pallas kernel.
# ----------------------------------------------------------------------------
def init_mobilenet_params(key, i=3, cfg=(64,)):
    layers = []
    in_planes = i
    for x in cfg:
        out_planes = x if isinstance(x, int) else x[0]
        # TODO(synk): stride from tuple cfg entries (stride != 1) unsupported.
        key, k1, k2, k3, k4, k5, k6, k7, k8, k9, k10 = jax.random.split(key, 11)

        # conv1: depthwise, PyTorch layout (Cin, 1, 3, 3)
        w_dw = 0.1 * jax.random.normal(k1, (in_planes, 1, 3, 3), jnp.float32)
        gamma1 = 1.0 + 0.1 * jax.random.normal(k2, (in_planes,), jnp.float32)
        beta1 = 0.1 * jax.random.normal(k3, (in_planes,), jnp.float32)
        mean1 = 0.1 * jax.random.normal(k4, (in_planes,), jnp.float32)
        var1 = 1.0 + 0.1 * jnp.abs(jax.random.normal(k5, (in_planes,), jnp.float32))

        # conv2: pointwise, PyTorch layout (Cout, Cin, 1, 1)
        w_pw = 0.1 * jax.random.normal(k6, (out_planes, in_planes, 1, 1), jnp.float32)
        gamma2 = 1.0 + 0.1 * jax.random.normal(k7, (out_planes,), jnp.float32)
        beta2 = 0.1 * jax.random.normal(k8, (out_planes,), jnp.float32)
        mean2 = 0.1 * jax.random.normal(k9, (out_planes,), jnp.float32)
        var2 = 1.0 + 0.1 * jnp.abs(jax.random.normal(k10, (out_planes,), jnp.float32))

        # Fold inference BN into scale/shift, then fold scale into the weights.
        scale1 = gamma1 / jnp.sqrt(var1 + BN_EPS)
        shift1 = beta1 - mean1 * scale1
        scale2 = gamma2 / jnp.sqrt(var2 + BN_EPS)
        shift2 = beta2 - mean2 * scale2

        w_dw_hwc = jnp.transpose(w_dw[:, 0], (1, 2, 0))        # (3, 3, Cin)
        w_dw_s = w_dw_hwc * scale1[None, None, :]              # BN1 scale folded
        w_pw_io = jnp.transpose(w_pw[:, :, 0, 0], (1, 0))      # (Cin, Cout)
        w_pw_s = w_pw_io * scale2[None, :]                     # BN2 scale folded

        # Pad Cout to a multiple of 128 (lane-dense output store); pad
        # channels have zero weight & shift -> ReLU(0) == 0.
        cout_pad = _round_up(out_planes, LANE)
        w_pw_s = jnp.pad(w_pw_s, ((0, 0), (0, cout_pad - out_planes)))
        shift2_p = jnp.pad(shift2, (0, cout_pad - out_planes))

        layers.append(dict(
            # raw params (reference path, mirrors the PyTorch module)
            w_dw=w_dw, w_pw=w_pw,
            bn1=(gamma1, beta1, mean1, var1),
            bn2=(gamma2, beta2, mean2, var2),
            # folded / packed params (Pallas kernel path)
            w_dw_s=w_dw_s, shift1=shift1.reshape(1, in_planes),
            w_pw_s=w_pw_s, shift2=shift2_p.reshape(1, cout_pad),
            cout=out_planes))
        in_planes = out_planes
    return layers


# ----------------------------------------------------------------------------
# MobileNet forward (wrapper): NCHW in / NCHW out, like the PyTorch module
# ----------------------------------------------------------------------------
def mobilenet_forward(params, x_nchw, dilation=1):
    out = jnp.transpose(x_nchw, (0, 2, 3, 1))          # NCHW -> NHWC (lanes = C)
    for p in params:
        out = block_fused(out, p, dilation)[..., :p["cout"]]  # drop pad channels
    return jnp.transpose(out, (0, 3, 1, 2))            # NHWC -> NCHW (fuses w/ slice)


# ----------------------------------------------------------------------------
# Pure-JAX reference (unfused, raw weights, eval-mode BN) for correctness
# ----------------------------------------------------------------------------
def mobilenet_reference(params, x_nchw, dilation=1):
    out = x_nchw
    for p in params:
        C = out.shape[1]
        out = jax.lax.conv_general_dilated(
            out, p["w_dw"], window_strides=(1, 1),
            padding=((dilation, dilation), (dilation, dilation)),
            rhs_dilation=(dilation, dilation),
            dimension_numbers=("NCHW", "OIHW", "NCHW"),
            feature_group_count=C)
        g, b, m, v = p["bn1"]
        out = (out - m[None, :, None, None]) / jnp.sqrt(v[None, :, None, None] + BN_EPS)
        out = jnp.maximum(out * g[None, :, None, None] + b[None, :, None, None], 0.0)
        out = jax.lax.conv_general_dilated(
            out, p["w_pw"], window_strides=(1, 1), padding=((0, 0), (0, 0)),
            dimension_numbers=("NCHW", "OIHW", "NCHW"))
        g, b, m, v = p["bn2"]
        out = (out - m[None, :, None, None]) / jnp.sqrt(v[None, :, None, None] + BN_EPS)
        out = jnp.maximum(out * g[None, :, None, None] + b[None, :, None, None], 0.0)
    return out


if __name__ == "__main__":
    key = jax.random.PRNGKey(0)
    k_params, k_x = jax.random.split(key)

    # MobileNet defaults: i=3 input channels, cfg=[64], dilation=1
    params = init_mobilenet_params(k_params, i=3, cfg=(64,))
    x = jax.random.normal(k_x, (2, 3, 16, 16), jnp.float32)   # NCHW like PyTorch

    fwd = jax.jit(lambda xx: mobilenet_forward(params, xx, dilation=1))
    out = jax.block_until_ready(fwd(x))
    assert out.shape == (2, 64, 16, 16), out.shape

    ref = jax.block_until_ready(mobilenet_reference(params, x, dilation=1))
    err = float(jnp.max(jnp.abs(out - ref)))
    assert err < 1e-4, err

    print("KERNEL_OK")
</pallas_src>

<mosaic_0001>
module attributes {stable_mosaic.version = 11 : i64} {
  func.func @_block_fused_kernel(%arg0: i32, %arg1: memref<1x18x18x3xf32, #tpu.memory_space<vmem>>, %arg2: memref<3x3x3xf32, #tpu.memory_space<vmem>>, %arg3: memref<1x3xf32, #tpu.memory_space<vmem>>, %arg4: memref<3x128xf32, #tpu.memory_space<vmem>>, %arg5: memref<1x128xf32, #tpu.memory_space<vmem>>, %arg6: memref<1x16x16x128xf32, #tpu.memory_space<vmem>>) attributes {dimension_semantics = [#tpu.dimension_semantics<parallel>], iteration_bounds = array<i64: 2>, scalar_prefetch = 0 : i64, scratch_operands = 0 : i64, tpu.core_type = #tpu.core_type<tc>, window_params = [{transform_indices = @transform_0, window_bounds = array<i64: 1, 18, 18, 3>}, {pipeline_mode = #tpu.pipeline_mode<synchronous>, transform_indices = @transform_1, window_bounds = array<i64: 3, 3, 3>}, {pipeline_mode = #tpu.pipeline_mode<synchronous>, transform_indices = @transform_2, window_bounds = array<i64: 1, 3>}, {pipeline_mode = #tpu.pipeline_mode<synchronous>, transform_indices = @transform_3, window_bounds = array<i64: 3, 128>}, {pipeline_mode = #tpu.pipeline_mode<synchronous>, transform_indices = @transform_4, window_bounds = array<i64: 1, 128>}, {transform_indices = @transform_5, window_bounds = array<i64: 1, 16, 16, 128>}]} {
    %c0 = arith.constant 0 : index
    %c0_0 = arith.constant 0 : index
    %c0_1 = arith.constant 0 : index
    %0 = vector.load %arg2[%c0, %c0_0, %c0_1] : memref<3x3x3xf32, #tpu.memory_space<vmem>>, vector<3x3x3xf32>
    %c0_2 = arith.constant 0 : index
    %c0_3 = arith.constant 0 : index
    %c0_4 = arith.constant 0 : index
    %c0_5 = arith.constant 0 : index
    %1 = vector.load %arg1[%c0_2, %c0_3, %c0_4, %c0_5] : memref<1x18x18x3xf32, #tpu.memory_space<vmem>>, vector<1x16x16x3xf32>
    %2 = vector.shape_cast %1 : vector<1x16x16x3xf32> to vector<16x16x3xf32>
    %3 = vector.extract_strided_slice %0 {offsets = [0, 0, 0], sizes = [1, 1, 3], strides = [1, 1, 1]} : vector<3x3x3xf32> to vector<1x1x3xf32>
    %4 = vector.shape_cast %3 : vector<1x1x3xf32> to vector<3xf32>
    %5 = vector.shape_cast %4 : vector<3xf32> to vector<1x1x3xf32>
    %6 = vector.broadcast %5 : vector<1x1x3xf32> to vector<16x16x3xf32>
    %7 = arith.mulf %2, %6 : vector<16x16x3xf32>
    %c0_6 = arith.constant 0 : index
    %c0_7 = arith.constant 0 : index
    %c1 = arith.constant 1 : index
    %c0_8 = arith.constant 0 : index
    %8 = vector.load %arg1[%c0_6, %c0_7, %c1, %c0_8] : memref<1x18x18x3xf32, #tpu.memory_space<vmem>>, vector<1x16x16x3xf32>
    %9 = vector.shape_cast %8 : vector<1x16x16x3xf32> to vector<16x16x3xf32>
    %10 = vector.extract_strided_slice %0 {offsets = [0, 1, 0], sizes = [1, 1, 3], strides = [1, 1, 1]} : vector<3x3x3xf32> to vector<1x1x3xf32>
    %11 = vector.shape_cast %10 : vector<1x1x3xf32> to vector<3xf32>
    %12 = vector.shape_cast %11 : vector<3xf32> to vector<1x1x3xf32>
    %13 = vector.broadcast %12 : vector<1x1x3xf32> to vector<16x16x3xf32>
    %14 = arith.mulf %9, %13 : vector<16x16x3xf32>
    %15 = arith.addf %7, %14 : vector<16x16x3xf32>
    %c0_9 = arith.constant 0 : index
    %c0_10 = arith.constant 0 : index
    %c2 = arith.constant 2 : index
    %c0_11 = arith.constant 0 : index
    %16 = vector.load %arg1[%c0_9, %c0_10, %c2, %c0_11] : memref<1x18x18x3xf32, #tpu.memory_space<vmem>>, vector<1x16x16x3xf32>
    %17 = vector.shape_cast %16 : vector<1x16x16x3xf32> to vector<16x16x3xf32>
    %18 = vector.extract_strided_slice %0 {offsets = [0, 2, 0], sizes = [1, 1, 3], strides = [1, 1, 1]} : vector<3x3x3xf32> to vector<1x1x3xf32>
    %19 = vector.shape_cast %18 : vector<1x1x3xf32> to vector<3xf32>
    %20 = vector.shape_cast %19 : vector<3xf32> to vector<1x1x3xf32>
    %21 = vector.broadcast %20 : vector<1x1x3xf32> to vector<16x16x3xf32>
    %22 = arith.mulf %17, %21 : vector<16x16x3xf32>
    %23 = arith.addf %15, %22 : vector<16x16x3xf32>
    %c0_12 = arith.constant 0 : index
    %c1_13 = arith.constant 1 : index
    %c0_14 = arith.constant 0 : index
    %c0_15 = arith.constant 0 : index
    %24 = vector.load %arg1[%c0_12, %c1_13, %c0_14, %c0_15] : memref<1x18x18x3xf32, #tpu.memory_space<vmem>>, vector<1x16x16x3xf32>
    %25 = vector.shape_cast %24 : vector<1x16x16x3xf32> to vector<16x16x3xf32>
    %26 = vector.extract_strided_slice %0 {offsets = [1, 0, 0], sizes = [1, 1, 3], strides = [1, 1, 1]} : vector<3x3x3xf32> to vector<1x1x3xf32>
    %27 = vector.shape_cast %26 : vector<1x1x3xf32> to vector<3xf32>
    %28 = vector.shape_cast %27 : vector<3xf32> to vector<1x1x3xf32>
    %29 = vector.broadcast %28 : vector<1x1x3xf32> to vector<16x16x3xf32>
    %30 = arith.mulf %25, %29 : vector<16x16x3xf32>
    %31 = arith.addf %23, %30 : vector<16x16x3xf32>
    %c0_16 = arith.constant 0 : index
    %c1_17 = arith.constant 1 : index
    %c1_18 = arith.constant 1 : index
    %c0_19 = arith.constant 0 : index
    %32 = vector.load %arg1[%c0_16, %c1_17, %c1_18, %c0_19] : memref<1x18x18x3xf32, #tpu.memory_space<vmem>>, vector<1x16x16x3xf32>
    %33 = vector.shape_cast %32 : vector<1x16x16x3xf32> to vector<16x16x3xf32>
    %34 = vector.extract_strided_slice %0 {offsets = [1, 1, 0], sizes = [1, 1, 3], strides = [1, 1, 1]} : vector<3x3x3xf32> to vector<1x1x3xf32>
    %35 = vector.shape_cast %34 : vector<1x1x3xf32> to vector<3xf32>
    %36 = vector.shape_cast %35 : vector<3xf32> to vector<1x1x3xf32>
    %37 = vector.broadcast %36 : vector<1x1x3xf32> to vector<16x16x3xf32>
    %38 = arith.mulf %33, %37 : vector<16x16x3xf32>
    %39 = arith.addf %31, %38 : vector<16x16x3xf32>
    %c0_20 = arith.constant 0 : index
    %c1_21 = arith.constant 1 : index
    %c2_22 = arith.constant 2 : index
    %c0_23 = arith.constant 0 : index
    %40 = vector.load %arg1[%c0_20, %c1_21, %c2_22, %c0_23] : memref<1x18x18x3xf32, #tpu.memory_space<vmem>>, vector<1x16x16x3xf32>
    %41 = vector.shape_cast %40 : vector<1x16x16x3xf32> to vector<16x16x3xf32>
    %42 = vector.extract_strided_slice %0 {offsets = [1, 2, 0], sizes = [1, 1, 3], strides = [1, 1, 1]} : vector<3x3x3xf32> to vector<1x1x3xf32>
    %43 = vector.shape_cast %42 : vector<1x1x3xf32> to vector<3xf32>
    %44 = vector.shape_cast %43 : vector<3xf32> to vector<1x1x3xf32>
    %45 = vector.broadcast %44 : vector<1x1x3xf32> to vector<16x16x3xf32>
    %46 = arith.mulf %41, %45 : vector<16x16x3xf32>
    %47 = arith.addf %39, %46 : vector<16x16x3xf32>
    %c0_24 = arith.constant 0 : index
    %c2_25 = arith.constant 2 : index
    %c0_26 = arith.constant 0 : index
    %c0_27 = arith.constant 0 : index
    %48 = vector.load %arg1[%c0_24, %c2_25, %c0_26, %c0_27] : memref<1x18x18x3xf32, #tpu.memory_space<vmem>>, vector<1x16x16x3xf32>
    %49 = vector.shape_cast %48 : vector<1x16x16x3xf32> to vector<16x16x3xf32>
    %50 = vector.extract_strided_slice %0 {offsets = [2, 0, 0], sizes = [1, 1, 3], strides = [1, 1, 1]} : vector<3x3x3xf32> to vector<1x1x3xf32>
    %51 = vector.shape_cast %50 : vector<1x1x3xf32> to vector<3xf32>
    %52 = vector.shape_cast %51 : vector<3xf32> to vector<1x1x3xf32>
    %53 = vector.broadcast %52 : vector<1x1x3xf32> to vector<16x16x3xf32>
    %54 = arith.mulf %49, %53 : vector<16x16x3xf32>
    %55 = arith.addf %47, %54 : vector<16x16x3xf32>
    %c0_28 = arith.constant 0 : index
    %c2_29 = arith.constant 2 : index
    %c1_30 = arith.constant 1 : index
    %c0_31 = arith.constant 0 : index
    %56 = vector.load %arg1[%c0_28, %c2_29, %c1_30, %c0_31] : memref<1x18x18x3xf32, #tpu.memory_space<vmem>>, vector<1x16x16x3xf32>
    %57 = vector.shape_cast %56 : vector<1x16x16x3xf32> to vector<16x16x3xf32>
    %58 = vector.extract_strided_slice %0 {offsets = [2, 1, 0], sizes = [1, 1, 3], strides = [1, 1, 1]} : vector<3x3x3xf32> to vector<1x1x3xf32>
    %59 = vector.shape_cast %58 : vector<1x1x3xf32> to vector<3xf32>
    %60 = vector.shape_cast %59 : vector<3xf32> to vector<1x1x3xf32>
    %61 = vector.broadcast %60 : vector<1x1x3xf32> to vector<16x16x3xf32>
    %62 = arith.mulf %57, %61 : vector<16x16x3xf32>
    %63 = arith.addf %55, %62 : vector<16x16x3xf32>
    %c0_32 = arith.constant 0 : index
    %c2_33 = arith.constant 2 : index
    %c2_34 = arith.constant 2 : index
    %c0_35 = arith.constant 0 : index
    %64 = vector.load %arg1[%c0_32, %c2_33, %c2_34, %c0_35] : memref<1x18x18x3xf32, #tpu.memory_space<vmem>>, vector<1x16x16x3xf32>
    %65 = vector.shape_cast %64 : vector<1x16x16x3xf32> to vector<16x16x3xf32>
    %66 = vector.extract_strided_slice %0 {offsets = [2, 2, 0], sizes = [1, 1, 3], strides = [1, 1, 1]} : vector<3x3x3xf32> to vector<1x1x3xf32>
    %67 = vector.shape_cast %66 : vector<1x1x3xf32> to vector<3xf32>
    %68 = vector.shape_cast %67 : vector<3xf32> to vector<1x1x3xf32>
    %69 = vector.broadcast %68 : vector<1x1x3xf32> to vector<16x16x3xf32>
    %70 = arith.mulf %65, %69 : vector<16x16x3xf32>
    %71 = arith.addf %63, %70 : vector<16x16x3xf32>
    %c0_36 = arith.constant 0 : index
    %c0_37 = arith.constant 0 : index
    %72 = vector.load %arg3[%c0_36, %c0_37] : memref<1x3xf32, #tpu.memory_space<vmem>>, vector<1x3xf32>
    %73 = vector.shape_cast %72 : vector<1x3xf32> to vector<3xf32>
    %74 = vector.shape_cast %73 : vector<3xf32> to vector<1x1x3xf32>
    %75 = vector.broadcast %74 : vector<1x1x3xf32> to vector<16x16x3xf32>
    %76 = arith.addf %71, %75 : vector<16x16x3xf32>
    %cst = arith.constant 0.000000e+00 : f32
    %77 = vector.broadcast %cst : f32 to vector<16x16x3xf32>
    %78 = arith.maximumf %76, %77 : vector<16x16x3xf32>
    %c0_38 = arith.constant 0 : index
    %c0_39 = arith.constant 0 : index
    %79 = vector.load %arg4[%c0_38, %c0_39] : memref<3x128xf32, #tpu.memory_space<vmem>>, vector<3x128xf32>
    %80 = vector.extract_strided_slice %78 {offsets = [0, 0, 0], sizes = [16, 16, 1], strides = [1, 1, 1]} : vector<16x16x3xf32> to vector<16x16x1xf32>
    %81 = vector.extract_strided_slice %79 {offsets = [0, 0], sizes = [1, 128], strides = [1, 1]} : vector<3x128xf32> to vector<1x128xf32>
    %82 = vector.shape_cast %81 : vector<1x128xf32> to vector<128xf32>
    %83 = vector.shape_cast %82 : vector<128xf32> to vector<1x1x128xf32>
    %84 = vector.broadcast %80 : vector<16x16x1xf32> to vector<16x16x128xf32>
    %85 = vector.broadcast %83 : vector<1x1x128xf32> to vector<16x16x128xf32>
    %86 = arith.mulf %84, %85 : vector<16x16x128xf32>
    %87 = vector.extract_strided_slice %78 {offsets = [0, 0, 1], sizes = [16, 16, 1], strides = [1, 1, 1]} : vector<16x16x3xf32> to vector<16x16x1xf32>
    %88 = vector.extract_strided_slice %79 {offsets = [1, 0], sizes = [1, 128], strides = [1, 1]} : vector<3x128xf32> to vector<1x128xf32>
    %89 = vector.shape_cast %88 : vector<1x128xf32> to vector<128xf32>
    %90 = vector.shape_cast %89 : vector<128xf32> to vector<1x1x128xf32>
    %91 = vector.broadcast %87 : vector<16x16x1xf32> to vector<16x16x128xf32>
    %92 = vector.broadcast %90 : vector<1x1x128xf32> to vector<16x16x128xf32>
    %93 = arith.mulf %91, %92 : vector<16x16x128xf32>
    %94 = arith.addf %86, %93 : vector<16x16x128xf32>
    %95 = vector.extract_strided_slice %78 {offsets = [0, 0, 2], sizes = [16, 16, 1], strides = [1, 1, 1]} : vector<16x16x3xf32> to vector<16x16x1xf32>
    %96 = vector.extract_strided_slice %79 {offsets = [2, 0], sizes = [1, 128], strides = [1, 1]} : vector<3x128xf32> to vector<1x128xf32>
    %97 = vector.shape_cast %96 : vector<1x128xf32> to vector<128xf32>
    %98 = vector.shape_cast %97 : vector<128xf32> to vector<1x1x128xf32>
    %99 = vector.broadcast %95 : vector<16x16x1xf32> to vector<16x16x128xf32>
    %100 = vector.broadcast %98 : vector<1x1x128xf32> to vector<16x16x128xf32>
    %101 = arith.mulf %99, %100 : vector<16x16x128xf32>
    %102 = arith.addf %94, %101 : vector<16x16x128xf32>
    %c0_40 = arith.constant 0 : index
    %c0_41 = arith.constant 0 : index
    %103 = vector.load %arg5[%c0_40, %c0_41] : memref<1x128xf32, #tpu.memory_space<vmem>>, vector<1x128xf32>
    %104 = vector.shape_cast %103 : vector<1x128xf32> to vector<128xf32>
    %105 = vector.shape_cast %104 : vector<128xf32> to vector<1x1x128xf32>
    %106 = vector.broadcast %105 : vector<1x1x128xf32> to vector<16x16x128xf32>
    %107 = arith.addf %102, %106 : vector<16x16x128xf32>
    %cst_42 = arith.constant 0.000000e+00 : f32
    %108 = vector.broadcast %cst_42 : f32 to vector<16x16x128xf32>
    %109 = arith.maximumf %107, %108 : vector<16x16x128xf32>
    %c0_43 = arith.constant 0 : index
    %c0_44 = arith.constant 0 : index
    %c0_45 = arith.constant 0 : index
    %c0_46 = arith.constant 0 : index
    %110 = vector.load %arg6[%c0_43, %c0_44, %c0_45, %c0_46] : memref<1x16x16x128xf32, #tpu.memory_space<vmem>>, vector<1x16x16x128xf32>
    %111 = vector.shape_cast %110 : vector<1x16x16x128xf32> to vector<16x16x128xf32>
    %112 = vector.shape_cast %109 : vector<16x16x128xf32> to vector<1x16x16x128xf32>
    tpu.vector_store %arg6[%c0_43, %c0_44, %c0_45, %c0_46], %112 {strides = array<i32>} : memref<1x16x16x128xf32, #tpu.memory_space<vmem>>, vector<1x16x16x128xf32>,
    return
  }
  func.func @transform_0(%arg0: i32) -> (i32, i32, i32, i32) {
    %c0_i32 = arith.constant 0 : i32
    %c0_i32_0 = arith.constant 0 : i32
    %c0_i32_1 = arith.constant 0 : i32
    %c0_i32_2 = arith.constant 0 : i32
    return %arg0, %c0_i32, %c0_i32_0, %c0_i32_1 : i32, i32, i32, i32
  }
  func.func @transform_1(%arg0: i32) -> (i32, i32, i32) {
    %c0_i32 = arith.constant 0 : i32
    %c0_i32_0 = arith.constant 0 : i32
    %c0_i32_1 = arith.constant 0 : i32
    %c0_i32_2 = arith.constant 0 : i32
    return %c0_i32, %c0_i32_0, %c0_i32_1 : i32, i32, i32
  }
  func.func @transform_2(%arg0: i32) -> (i32, i32) {
    %c0_i32 = arith.constant 0 : i32
    %c0_i32_0 = arith.constant 0 : i32
    %c0_i32_1 = arith.constant 0 : i32
    return %c0_i32, %c0_i32_0 : i32, i32
  }
  func.func @transform_3(%arg0: i32) -> (i32, i32) {
    %c0_i32 = arith.constant 0 : i32
    %c0_i32_0 = arith.constant 0 : i32
    %c0_i32_1 = arith.constant 0 : i32
    return %c0_i32, %c0_i32_0 : i32, i32
  }
  func.func @transform_4(%arg0: i32) -> (i32, i32) {
    %c0_i32 = arith.constant 0 : i32
    %c0_i32_0 = arith.constant 0 : i32
    %c0_i32_1 = arith.constant 0 : i32
    return %c0_i32, %c0_i32_0 : i32, i32
  }
  func.func @transform_5(%arg0: i32) -> (i32, i32, i32, i32) {
    %c0_i32 = arith.constant 0 : i32
    %c0_i32_0 = arith.constant 0 : i32
    %c0_i32_1 = arith.constant 0 : i32
    %c0_i32_2 = arith.constant 0 : i32
    return %arg0, %c0_i32, %c0_i32_0, %c0_i32_1 : i32, i32, i32, i32
  }
}

</mosaic_0001>

<llo_original>
// kernel: _lambda_.1
$region0: #{_lambda_.1}
  #allocation0 [shape = 'u32[]', space=smem, size = 0x4, offset = 0x4, fixed_abs, tag = 'smem constant byte address 0x4 - core index']
  #allocation1 [shape = 'u32[144,128]{1,0:T(1,128)}', space=vmem, size = 0x12000, scoped, tag = 'internal scratch']
  %s0 = inlined_call_operand.vmem [shape: f32[2,18,18,3], index: 0, kind: input, shape index: {}]
  %s1 = inlined_call_operand.vmem [shape: f32[3,3,3], index: 1, kind: input, shape index: {}]
  %s2 = inlined_call_operand.vmem [shape: f32[1,3], index: 2, kind: input, shape index: {}]
  %s3 = inlined_call_operand.vmem [shape: f32[3,128], index: 3, kind: input, shape index: {}]
  %s4 = inlined_call_operand.vmem [shape: f32[1,128], index: 4, kind: input, shape index: {}]
  %s5 = inlined_call_operand.vmem [shape: f32[2,16,16,128], index: 5, kind: output, shape index: {}]
  %s6 = sld [smem:[#allocation0]]
  $region53: #{_lambda_.1} parent=0
    _
  %s8 = ssub.s32 1, %s6
  %s9 = scalar_select 0, %s8, %s6
  loop: start=0, step=1, limit=4
  $region2: #{_lambda_.1} parent=0 // loop_pre_header
    _
  $region3: #{_lambda_.1} parent=0 // loop_header
    %s11 = sphi 0, %s15
    %p12 = scmp.ge.s32.totalorder %s11, 4
    %s21 = sphi 0, %s23
    %s24 = sphi 0, %s21
    %s25 = sphi 0, %s24
    %s41 = sphi 0, %s25
    %s45 = sphi 0, %s45
    %s47 = sphi 0, %s45
    %s48 = sphi 0, %s47
    %s62 = sphi 0, %s48
    %s66 = sphi 0, %s66
    %s68 = sphi 0, %s66
    %s69 = sphi 0, %s68
    %s83 = sphi 0, %s69
    %s87 = sphi 0, %s87
    %s89 = sphi 0, %s87
    %s90 = sphi 0, %s89
    %s104 = sphi 0, %s90
    %s108 = sphi 0, %s108
    %s110 = sphi 0, %s108
    %s111 = sphi 0, %s110
    %s125 = sphi 0, %s111
    %s131 = sphi 0, %s133
    %s134 = sphi 0, %s131
    %s135 = sphi 0, %s134
    %s151 = sphi 0, %s135
  $region4: #{_lambda_.1} parent=0 // loop_header_branch
    %14 = sbr.rel (%p12) target = $region8
  $region5: #{_lambda_.1} parent=0 // loop_body
    %s16 = ssub.s32 %s11, 1
    %s17 = ssub.s32 %s11, 2
    %s18 = sadd.s32 %s11, 1
    %s19 = ssub.s32 %s11, %s18
    %p20 = scmp.eq.s32.totalorder %s19, 0
    %s22 = sadd.s32 %s21, 1
    %s23 = scalar_select %p20, %s21, %s22
    %p26 = pneg %p20
    %p27 = scmp.eq.s32.totalorder %s11, 1
    %p28 = por %p26, %p27
    %p29 = scmp.ne.s32.totalorder %s21, %s24
    %p30 = scmp.eq.s32.totalorder %s11, 0
    %p31 = por %p29, %p30
    %p32 = scmp.ne.s32.totalorder %s21, %s24
    %p33 = scmp.eq.s32.totalorder %s16, 1
    %p34 = por %p32, %p33
    %p35 = scmp.ne.s32.totalorder %s24, %s25
    %p36 = scmp.eq.s32.totalorder %s16, 0
    %p37 = por %p35, %p36
    %p38 = scmp.ne.s32.totalorder %s24, %s25
    %p39 = scmp.eq.s32.totalorder %s17, 1
    %p40 = por %p38, %p39
    %p42 = scmp.ne.s32.totalorder %s25, %s41
    %p43 = scmp.eq.s32.totalorder %s17, 0
    %p44 = por %p42, %p43
    %s46 = sadd.s32 %s45, 1
    %p49 = scmp.eq.s32.totalorder %s11, 1
    %p50 = scmp.ne.s32.totalorder %s45, %s47
    %p51 = scmp.eq.s32.totalorder %s11, 0
    %p52 = por %p50, %p51
    %p53 = scmp.ne.s32.totalorder %s45, %s47
    %p54 = scmp.eq.s32.totalorder %s16, 1
    %p55 = por %p53, %p54
    %p56 = scmp.ne.s32.totalorder %s47, %s48
    %p57 = scmp.eq.s32.totalorder %s16, 0
    %p58 = por %p56, %p57
    %p59 = scmp.ne.s32.totalorder %s47, %s48
    %p60 = scmp.eq.s32.totalorder %s17, 1
    %p61 = por %p59, %p60
    %p63 = scmp.ne.s32.totalorder %s48, %s62
    %p64 = scmp.eq.s32.totalorder %s17, 0
    %p65 = por %p63, %p64
    %s67 = sadd.s32 %s66, 1
    %p70 = scmp.eq.s32.totalorder %s11, 1
    %p71 = scmp.ne.s32.totalorder %s66, %s68
    %p72 = scmp.eq.s32.totalorder %s11, 0
    %p73 = por %p71, %p72
    %p74 = scmp.ne.s32.totalorder %s66, %s68
    %p75 = scmp.eq.s32.totalorder %s16, 1
    %p76 = por %p74, %p75
    %p77 = scmp.ne.s32.totalorder %s68, %s69
    %p78 = scmp.eq.s32.totalorder %s16, 0
    %p79 = por %p77, %p78
    %p80 = scmp.ne.s32.totalorder %s68, %s69
    %p81 = scmp.eq.s32.totalorder %s17, 1
    %p82 = por %p80, %p81
    %p84 = scmp.ne.s32.totalorder %s69, %s83
    %p85 = scmp.eq.s32.totalorder %s17, 0
    %p86 = por %p84, %p85
    %s88 = sadd.s32 %s87, 1
    %p91 = scmp.eq.s32.totalorder %s11, 1
    %p92 = scmp.ne.s32.totalorder %s87, %s89
    %p93 = scmp.eq.s32.totalorder %s11, 0
    %p94 = por %p92, %p93
    %p95 = scmp.ne.s32.totalorder %s87, %s89
    %p96 = scmp.eq.s32.totalorder %s16, 1
    %p97 = por %p95, %p96
    %p98 = scmp.ne.s32.totalorder %s89, %s90
    %p99 = scmp.eq.s32.totalorder %s16, 0
    %p100 = por %p98, %p99
    %p101 = scmp.ne.s32.totalorder %s89, %s90
    %p102 = scmp.eq.s32.totalorder %s17, 1
    %p103 = por %p101, %p102
    %p105 = scmp.ne.s32.totalorder %s90, %s104
    %p106 = scmp.eq.s32.totalorder %s17, 0
    %p107 = por %p105, %p106
    %s109 = sadd.s32 %s108, 1
    %p112 = scmp.eq.s32.totalorder %s11, 1
    %p113 = scmp.ne.s32.totalorder %s108, %s110
    %p114 = scmp.eq.s32.totalorder %s11, 0
    %p115 = por %p113, %p114
    %p116 = scmp.ne.s32.totalorder %s108, %s110
    %p117 = scmp.eq.s32.totalorder %s16, 1
    %p118 = por %p116, %p117
    %p119 = scmp.ne.s32.totalorder %s110, %s111
    %p120 = scmp.eq.s32.totalorder %s16, 0
    %p121 = por %p119, %p120
    %p122 = scmp.ne.s32.totalorder %s110, %s111
    %p123 = scmp.eq.s32.totalorder %s17, 1
    %p124 = por %p122, %p123
    %p126 = scmp.ne.s32.totalorder %s111, %s125
    %p127 = scmp.eq.s32.totalorder %s17, 0
    %p128 = por %p126, %p127
    %s129 = ssub.s32 %s11, %s18
    %p130 = scmp.eq.s32.totalorder %s129, 0
    %s132 = sadd.s32 %s131, 1
    %s133 = scalar_select %p130, %s131, %s132
    %p136 = pneg %p130
    %p137 = scmp.eq.s32.totalorder %s11, 1
    %p138 = por %p136, %p137
    %p139 = scmp.ne.s32.totalorder %s131, %s134
    %p140 = scmp.eq.s32.totalorder %s11, 0
    %p141 = por %p139, %p140
    %p142 = scmp.ne.s32.totalorder %s131, %s134
    %p143 = scmp.eq.s32.totalorder %s16, 1
    %p144 = por %p142, %p143
    %p145 = scmp.ne.s32.totalorder %s134, %s135
    %p146 = scmp.eq.s32.totalorder %s16, 0
    %p147 = por %p145, %p146
    %p148 = scmp.ne.s32.totalorder %s134, %s135
    %p149 = scmp.eq.s32.totalorder %s17, 1
    %p150 = por %p148, %p149
    %p152 = scmp.ne.s32.totalorder %s135, %s151
    %p153 = scmp.eq.s32.totalorder %s17, 0
    %p154 = por %p152, %p153
    %p155 = scmp.le.s32.totalorder 1, %s11
    %p156 = scmp.lt.s32.totalorder %s11, 3
    %p157 = pnand %p155, %p156
    %p158 = pneg %p157
    // Predicated region
    $region9: #{_lambda_.1} parent=5 // pred_check
      _
    $region10: #{_lambda_.1} parent=5 // pred_check_branch
      %160 = sbr.rel (%p157) target = $region12
    $region11: #{_lambda_.1} parent=5 // pred_region
      %s161 = ssub.s32 %s11, 1
      // Predicated region
      $region13: #{_lambda_.1} parent=11 // pred_check
        %p162 = pneg %p58
      $region14: #{_lambda_.1} parent=11 // pred_check_branch
        %164 = sbr.rel (%p162) target = $region16
      $region15: #{_lambda_.1} parent=11 // pred_region
        _
      $region16: #{_lambda_.1} parent=11 // pred_fallthru
        _
      // Predicated region
      $region17: #{_lambda_.1} parent=11 // pred_check
        %p165 = pneg %p79
      $region18: #{_lambda_.1} parent=11 // pred_check_branch
        %167 = sbr.rel (%p165) target = $region20
      $region19: #{_lambda_.1} parent=11 // pred_region
        _
      $region20: #{_lambda_.1} parent=11 // pred_fallthru
        _
      // Predicated region
      $region21: #{_lambda_.1} parent=11 // pred_check
        %p168 = pneg %p100
      $region22: #{_lambda_.1} parent=11 // pred_check_branch
        %170 = sbr.rel (%p168) target = $region24
      $region23: #{_lambda_.1} parent=11 // pred_region
        _
      $region24: #{_lambda_.1} parent=11 // pred_fallthru
        _
      // Predicated region
      $region25: #{_lambda_.1} parent=11 // pred_check
        %p171 = pneg %p121
      $region26: #{_lambda_.1} parent=11 // pred_check_branch
        %173 = sbr.rel (%p171) target = $region28
      $region27: #{_lambda_.1} parent=11 // pred_region
        _
      $region28: #{_lambda_.1} parent=11 // pred_fallthru
        _
    $region12: #{_lambda_.1} parent=5 // pred_fallthru
      _
    %p174 = scmp.lt.s32.totalorder %s11, 2
    // Predicated region
    $region29: #{_lambda_.1} parent=5 // pred_check
      %p175 = pneg %p174
    $region30: #{_lambda_.1} parent=5 // pred_check_branch
      %177 = sbr.rel (%p175) target = $region32
    $region31: #{_lambda_.1} parent=5 // pred_region
      // Predicated region
      $region33: #{_lambda_.1} parent=31 // pred_check
        %p178 = pneg %p31
      $region34: #{_lambda_.1} parent=31 // pred_check_branch
        %180 = sbr.rel (%p178) target = $region36
      $region35: #{_lambda_.1} parent=31 // pred_region
        %p181 = scmp.lt.s32.totalorder %s11, 1
        %s182 = scalar_select %p181, %s11, 1
        %s183 = smul.addr %s182, 54
        %s184 = smul.addr %s183, 8
        %s185 = scalar_lea.vmem %s0, %s184
      $region36: #{_lambda_.1} parent=31 // pred_fallthru
        _
    $region32: #{_lambda_.1} parent=5 // pred_fallthru
      _
    %p186 = scmp.le.s32.totalorder 1, %s11
    %p187 = scmp.lt.s32.totalorder %s11, 3
    %p188 = pnand %p186, %p187
    %p189 = pneg %p188
    // Predicated region
    $region37: #{_lambda_.1} parent=5 // pred_check
      _
    $region38: #{_lambda_.1} parent=5 // pred_check_branch
      %191 = sbr.rel (%p188) target = $region40
    $region39: #{_lambda_.1} parent=5 // pred_region
      %s192 = ssub.s32 %s11, 1
      %p193 = scmp.lt.s32.totalorder %s16, 1
      %s194 = scalar_select %p193, %s16, 1
      %s195 = smul.addr %s194, 54
      %s196 = smul.addr %s195, 8
      %s197 = scalar_lea.vmem %s0, %s196
      %p198 = pneg %p37
      %p199 = pneg %p34
      %p200 = pneg %p58
      %p201 = pneg %p55
      %p202 = pneg %p79
      %p203 = pneg %p76
      %p204 = pneg %p100
      %p205 = pneg %p97
      %p206 = pneg %p121
      %p207 = pneg %p118
      %p208 = pneg %p147
      %p209 = pneg %p144
      %p210 = scmp.lt.s32.totalorder %s16, 1
      %s211 = scalar_select %p210, %s16, 1
      %s212 = smul.addr %s211, 32
      %s213 = smul.addr %s212, 8
      %s214 = scalar_lea.vmem %s5, %s213
      %p215 = scmp.lt.s32.totalorder %s16, 1
      %s216 = scalar_select %p215, %s16, 1
      %s217 = smul.addr %s216, 54
      %s218 = smul.addr %s217, 8
      %s219 = scalar_lea.vmem %s0, %s218
      %p220 = scmp.lt.s32.totalorder %s16, 1
      %s221 = scalar_select %p220, %s16, 1
      %s222 = smul.addr %s221, 32
      %s223 = smul.addr %s222, 8
      %s224 = scalar_lea.vmem %s5, %s223
      %v225 = vld [vmem:[%s1] sm:$0x7]
      %v226 = vld [vmem:[%s1 + $0x4] sm:$0x7]
      %v227 = vld [vmem:[%s1 + $0x8] sm:$0x7]
      %v228 = vld [vmem:[%s219] sm:$0xff]
      %v229 = vld [vmem:[%s219 + $0x8] sm:$0xff]
      %v230 = vld [vmem:[%s219 + $0x18] sm:$0xff]
      %v231 = vld [vmem:[%s219 + $0x20] sm:$0xff]
      %v232 = vld [vmem:[%s219 + $0x30] sm:$0xff]
      %v233 = vld [vmem:[%s219 + $0x38] sm:$0xff]
      %v234 = vld [vmem:[%s219 + $0x48] sm:$0xff]
      %v235 = vld [vmem:[%s219 + $0x50] sm:$0xff]
      %v236 = vld [vmem:[%s219 + $0x60] sm:$0xff]
      %v237 = vld [vmem:[%s219 + $0x68] sm:$0xff]
      %v238 = vld [vmem:[%s219 + $0x78] sm:$0xff]
      %v239 = vld [vmem:[%s219 + $0x80] sm:$0xff]
      %v240 = vld [vmem:[%s219 + $0x90] sm:$0xff]
      %v241 = vld [vmem:[%s219 + $0x98] sm:$0xff]
      %v242 = vld [vmem:[%s219 + $0xa8] sm:$0xff]
      %v243 = vld [vmem:[%s219 + $0xb0] sm:$0xff]
      %v244 = vld [vmem:[%s219 + $0xc0] sm:$0xff]
      %v245 = vld [vmem:[%s219 + $0xc8] sm:$0xff]
      %v246 = vld [vmem:[%s219 + $0xd8] sm:$0xff]
      %v247 = vld [vmem:[%s219 + $0xe0] sm:$0xff]
      %v248 = vld [vmem:[%s219 + $0xf0] sm:$0xff]
      %v249 = vld [vmem:[%s219 + $0xf8] sm:$0xff]
      %v250 = vld [vmem:[%s219 + $0x108] sm:$0xff]
      %v251 = vld [vmem:[%s219 + $0x110] sm:$0xff]
      %v252 = vld [vmem:[%s219 + $0x120] sm:$0xff]
      %v253 = vld [vmem:[%s219 + $0x128] sm:$0xff]
      %v254 = vld [vmem:[%s219 + $0x138] sm:$0xff]
      %v255 = vld [vmem:[%s219 + $0x140] sm:$0xff]
      %v256 = vld [vmem:[%s219 + $0x150] sm:$0xff]
      %v257 = vld [vmem:[%s219 + $0x158] sm:$0xff]
      %v258 = vld [vmem:[%s219 + $0x168] sm:$0xff]
      %v259 = vld [vmem:[%s219 + $0x170] sm:$0xff]
      %v260 = vlaneseq
      %v261 = vshrl.u32 %v260, 7
      %v262 = vsub.s32 0, %v261
      %v263 = vrot.slane %v225, %v262
      %v264 = vmul.f32 %v228, %v263
      %v265 = vmul.f32 %v229, %v263
      %v266 = vmul.f32 %v230, %v263
      %v267 = vmul.f32 %v231, %v263
      %v268 = vmul.f32 %v232, %v263
      %v269 = vmul.f32 %v233, %v263
      %v270 = vmul.f32 %v234, %v263
      %v271 = vmul.f32 %v235, %v263
      %v272 = vmul.f32 %v236, %v263
      %v273 = vmul.f32 %v237, %v263
      %v274 = vmul.f32 %v238, %v263
      %v275 = vmul.f32 %v239, %v263
      %v276 = vmul.f32 %v240, %v263
      %v277 = vmul.f32 %v241, %v263
      %v278 = vmul.f32 %v242, %v263
      %v279 = vmul.f32 %v243, %v263
      %v280 = vmul.f32 %v244, %v263
      %v281 = vmul.f32 %v245, %v263
      %v282 = vmul.f32 %v246, %v263
      %v283 = vmul.f32 %v247, %v263
      %v284 = vmul.f32 %v248, %v263
      %v285 = vmul.f32 %v249, %v263
      %v286 = vmul.f32 %v250, %v263
      %v287 = vmul.f32 %v251, %v263
      %v288 = vmul.f32 %v252, %v263
      %v289 = vmul.f32 %v253, %v263
      %v290 = vmul.f32 %v254, %v263
      %v291 = vmul.f32 %v255, %v263
      %v292 = vmul.f32 %v256, %v263
      %v293 = vmul.f32 %v257, %v263
      %v294 = vmul.f32 %v258, %v263
      %v295 = vmul.f32 %v259, %v263
      %v296 = vld [vmem:[%s219 + $0x1] sm:$0xff]
      %v297 = vld [vmem:[%s219 + $0x9] sm:$0xff]
      %v298 = vld [vmem:[%s219 + $0x19] sm:$0xff]
      %v299 = vld [vmem:[%s219 + $0x21] sm:$0xff]
      %v300 = vld [vmem:[%s219 + $0x31] sm:$0xff]
      %v301 = vld [vmem:[%s219 + $0x39] sm:$0xff]
      %v302 = vld [vmem:[%s219 + $0x49] sm:$0xff]
      %v303 = vld [vmem:[%s219 + $0x51] sm:$0xff]
      %v304 = vld [vmem:[%s219 + $0x61] sm:$0xff]
      %v305 = vld [vmem:[%s219 + $0x69] sm:$0xff]
      %v306 = vld [vmem:[%s219 + $0x79] sm:$0xff]
      %v307 = vld [vmem:[%s219 + $0x81] sm:$0xff]
      %v308 = vld [vmem:[%s219 + $0x91] sm:$0xff]
      %v309 = vld [vmem:[%s219 + $0x99] sm:$0xff]
      %v310 = vld [vmem:[%s219 + $0xa9] sm:$0xff]
      %v311 = vld [vmem:[%s219 + $0xb1] sm:$0xff]
      %v312 = vld [vmem:[%s219 + $0xc1] sm:$0xff]
      %v313 = vld [vmem:[%s219 + $0xc9] sm:$0xff]
      %v314 = vld [vmem:[%s219 + $0xd9] sm:$0xff]
      %v315 = vld [vmem:[%s219 + $0xe1] sm:$0xff]
      %v316 = vld [vmem:[%s219 + $0xf1] sm:$0xff]
      %v317 = vld [vmem:[%s219 + $0xf9] sm:$0xff]
      %v318 = vld [vmem:[%s219 + $0x109] sm:$0xff]
      %v319 = vld [vmem:[%s219 + $0x111] sm:$0xff]
      %v320 = vld [vmem:[%s219 + $0x121] sm:$0xff]
      %v321 = vld [vmem:[%s219 + $0x129] sm:$0xff]
      %v322 = vld [vmem:[%s219 + $0x139] sm:$0xff]
      %v323 = vld [vmem:[%s219 + $0x141] sm:$0xff]
      %v324 = vld [vmem:[%s219 + $0x151] sm:$0xff]
      %v325 = vld [vmem:[%s219 + $0x159] sm:$0xff]
      %v326 = vld [vmem:[%s219 + $0x169] sm:$0xff]
      %v327 = vld [vmem:[%s219 + $0x171] sm:$0xff]
      %v328 = vlaneseq
      %v329 = vshrl.u32 %v328, 7
      %v330 = vsub.s32 1, %v329
      %v331 = vrot.slane %v225, %v330
      %v332 = vmul.f32 %v296, %v331
      %v333 = vmul.f32 %v297, %v331
      %v334 = vmul.f32 %v298, %v331
      %v335 = vmul.f32 %v299, %v331
      %v336 = vmul.f32 %v300, %v331
      %v337 = vmul.f32 %v301, %v331
      %v338 = vmul.f32 %v302, %v331
      %v339 = vmul.f32 %v303, %v331
      %v340 = vmul.f32 %v304, %v331
      %v341 = vmul.f32 %v305, %v331
      %v342 = vmul.f32 %v306, %v331
      %v343 = vmul.f32 %v307, %v331
      %v344 = vmul.f32 %v308, %v331
      %v345 = vmul.f32 %v309, %v331
      %v346 = vmul.f32 %v310, %v331
      %v347 = vmul.f32 %v311, %v331
      %v348 = vmul.f32 %v312, %v331
      %v349 = vmul.f32 %v313, %v331
      %v350 = vmul.f32 %v314, %v331
      %v351 = vmul.f32 %v315, %v331
      %v352 = vmul.f32 %v316, %v331
      %v353 = vmul.f32 %v317, %v331
      %v354 = vmul.f32 %v318, %v331
      %v355 = vmul.f32 %v319, %v331
      %v356 = vmul.f32 %v320, %v331
      %v357 = vmul.f32 %v321, %v331
      %v358 = vmul.f32 %v322, %v331
      %v359 = vmul.f32 %v323, %v331
      %v360 = vmul.f32 %v324, %v331
      %v361 = vmul.f32 %v325, %v331
      %v362 = vmul.f32 %v326, %v331
      %v363 = vmul.f32 %v327, %v331
      %v364 = vadd.f32 %v264, %v332
      %v365 = vadd.f32 %v265, %v333
      %v366 = vadd.f32 %v266, %v334
      %v367 = vadd.f32 %v267, %v335
      %v368 = vadd.f32 %v268, %v336
      %v369 = vadd.f32 %v269, %v337
      %v370 = vadd.f32 %v270, %v338
      %v371 = vadd.f32 %v271, %v339
      %v372 = vadd.f32 %v272, %v340
      %v373 = vadd.f32 %v273, %v341
      %v374 = vadd.f32 %v274, %v342
      %v375 = vadd.f32 %v275, %v343
      %v376 = vadd.f32 %v276, %v344
      %v377 = vadd.f32 %v277, %v345
      %v378 = vadd.f32 %v278, %v346
      %v379 = vadd.f32 %v279, %v347
      %v380 = vadd.f32 %v280, %v348
      %v381 = vadd.f32 %v281, %v349
      %v382 = vadd.f32 %v282, %v350
      %v383 = vadd.f32 %v283, %v351
      %v384 = vadd.f32 %v284, %v352
      %v385 = vadd.f32 %v285, %v353
      %v386 = vadd.f32 %v286, %v354
      %v387 = vadd.f32 %v287, %v355
      %v388 = vadd.f32 %v288, %v356
      %v389 = vadd.f32 %v289, %v357
      %v390 = vadd.f32 %v290, %v358
      %v391 = vadd.f32 %v291, %v359
      %v392 = vadd.f32 %v292, %v360
      %v393 = vadd.f32 %v293, %v361
      %v394 = vadd.f32 %v294, %v362
      %v395 = vadd.f32 %v295, %v363
      %v396 = vld [vmem:[%s219 + $0x2] sm:$0xff]
      %v397 = vld [vmem:[%s219 + $0xa] sm:$0xff]
      %v398 = vld [vmem:[%s219 + $0x1a] sm:$0xff]
      %v399 = vld [vmem:[%s219 + $0x22] sm:$0xff]
      %v400 = vld [vmem:[%s219 + $0x32] sm:$0xff]
      %v401 = vld [vmem:[%s219 + $0x3a] sm:$0xff]
      %v402 = vld [vmem:[%s219 + $0x4a] sm:$0xff]
      %v403 = vld [vmem:[%s219 + $0x52] sm:$0xff]
      %v404 = vld [vmem:[%s219 + $0x62] sm:$0xff]
      %v405 = vld [vmem:[%s219 + $0x6a] sm:$0xff]
      %v406 = vld [vmem:[%s219 + $0x7a] sm:$0xff]
      %v407 = vld [vmem:[%s219 + $0x82] sm:$0xff]
      %v408 = vld [vmem:[%s219 + $0x92] sm:$0xff]
      %v409 = vld [vmem:[%s219 + $0x9a] sm:$0xff]
      %v410 = vld [vmem:[%s219 + $0xaa] sm:$0xff]
      %v411 = vld [vmem:[%s219 + $0xb2] sm:$0xff]
      %v412 = vld [vmem:[%s219 + $0xc2] sm:$0xff]
      %v413 = vld [vmem:[%s219 + $0xca] sm:$0xff]
      %v414 = vld [vmem:[%s219 + $0xda] sm:$0xff]
      %v415 = vld [vmem:[%s219 + $0xe2] sm:$0xff]
      %v416 = vld [vmem:[%s219 + $0xf2] sm:$0xff]
      %v417 = vld [vmem:[%s219 + $0xfa] sm:$0xff]
      %v418 = vld [vmem:[%s219 + $0x10a] sm:$0xff]
      %v419 = vld [vmem:[%s219 + $0x112] sm:$0xff]
      %v420 = vld [vmem:[%s219 + $0x122] sm:$0xff]
      %v421 = vld [vmem:[%s219 + $0x12a] sm:$0xff]
      %v422 = vld [vmem:[%s219 + $0x13a] sm:$0xff]
      %v423 = vld [vmem:[%s219 + $0x142] sm:$0xff]
      %v424 = vld [vmem:[%s219 + $0x152] sm:$0xff]
      %v425 = vld [vmem:[%s219 + $0x15a] sm:$0xff]
      %v426 = vld [vmem:[%s219 + $0x16a] sm:$0xff]
      %v427 = vld [vmem:[%s219 + $0x172] sm:$0xff]
      %v428 = vlaneseq
      %v429 = vshrl.u32 %v428, 7
      %v430 = vsub.s32 2, %v429
      %v431 = vrot.slane %v225, %v430
      %v432 = vmul.f32 %v396, %v431
      %v433 = vmul.f32 %v397, %v431
      %v434 = vmul.f32 %v398, %v431
      %v435 = vmul.f32 %v399, %v431
      %v436 = vmul.f32 %v400, %v431
      %v437 = vmul.f32 %v401, %v431
      %v438 = vmul.f32 %v402, %v431
      %v439 = vmul.f32 %v403, %v431
      %v440 = vmul.f32 %v404, %v431
      %v441 = vmul.f32 %v405, %v431
      %v442 = vmul.f32 %v406, %v431
      %v443 = vmul.f32 %v407, %v431
      %v444 = vmul.f32 %v408, %v431
      %v445 = vmul.f32 %v409, %v431
      %v446 = vmul.f32 %v410, %v431
      %v447 = vmul.f32 %v411, %v431
      %v448 = vmul.f32 %v412, %v431
      %v449 = vmul.f32 %v413, %v431
      %v450 = vmul.f32 %v414, %v431
      %v451 = vmul.f32 %v415, %v431
      %v452 = vmul.f32 %v416, %v431
      %v453 = vmul.f32 %v417, %v431
      %v454 = vmul.f32 %v418, %v431
      %v455 = vmul.f32 %v419, %v431
      %v456 = vmul.f32 %v420, %v431
      %v457 = vmul.f32 %v421, %v431
      %v458 = vmul.f32 %v422, %v431
      %v459 = vmul.f32 %v423, %v431
      %v460 = vmul.f32 %v424, %v431
      %v461 = vmul.f32 %v425, %v431
      %v462 = vmul.f32 %v426, %v431
      %v463 = vmul.f32 %v427, %v431
      %v464 = vadd.f32 %v364, %v432
      %v465 = vadd.f32 %v365, %v433
      %v466 = vadd.f32 %v366, %v434
      %v467 = vadd.f32 %v367, %v435
      %v468 = vadd.f32 %v368, %v436
      %v469 = vadd.f32 %v369, %v437
      %v470 = vadd.f32 %v370, %v438
      %v471 = vadd.f32 %v371, %v439
      %v472 = vadd.f32 %v372, %v440
      %v473 = vadd.f32 %v373, %v441
      %v474 = vadd.f32 %v374, %v442
      %v475 = vadd.f32 %v375, %v443
      %v476 = vadd.f32 %v376, %v444
      %v477 = vadd.f32 %v377, %v445
      %v478 = vadd.f32 %v378, %v446
      %v479 = vadd.f32 %v379, %v447
      %v480 = vadd.f32 %v380, %v448
      %v481 = vadd.f32 %v381, %v449
      %v482 = vadd.f32 %v382, %v450
      %v483 = vadd.f32 %v383, %v451
      %v484 = vadd.f32 %v384, %v452
      %v485 = vadd.f32 %v385, %v453
      %v486 = vadd.f32 %v386, %v454
      %v487 = vadd.f32 %v387, %v455
      %v488 = vadd.f32 %v388, %v456
      %v489 = vadd.f32 %v389, %v457
      %v490 = vadd.f32 %v390, %v458
      %v491 = vadd.f32 %v391, %v459
      %v492 = vadd.f32 %v392, %v460
      %v493 = vadd.f32 %v393, %v461
      %v494 = vadd.f32 %v394, %v462
      %v495 = vadd.f32 %v395, %v463
      %s496 = scalar_lea.vmem %s219, 24
      %v497 = vld [vmem:[%s496] sm:$0xff]
      %v498 = vld [vmem:[%s496 + $0x8] sm:$0xff]
      %v499 = vld [vmem:[%s496 + $0x18] sm:$0xff]
      %v500 = vld [vmem:[%s496 + $0x20] sm:$0xff]
      %v501 = vld [vmem:[%s496 + $0x30] sm:$0xff]
      %v502 = vld [vmem:[%s496 + $0x38] sm:$0xff]
      %v503 = vld [vmem:[%s496 + $0x48] sm:$0xff]
      %v504 = vld [vmem:[%s496 + $0x50] sm:$0xff]
      %v505 = vld [vmem:[%s496 + $0x60] sm:$0xff]
      %v506 = vld [vmem:[%s496 + $0x68] sm:$0xff]
      %v507 = vld [vmem:[%s496 + $0x78] sm:$0xff]
      %v508 = vld [vmem:[%s496 + $0x80] sm:$0xff]
      %v509 = vld [vmem:[%s496 + $0x90] sm:$0xff]
      %v510 = vld [vmem:[%s496 + $0x98] sm:$0xff]
      %v511 = vld [vmem:[%s496 + $0xa8] sm:$0xff]
      %v512 = vld [vmem:[%s496 + $0xb0] sm:$0xff]
      %v513 = vld [vmem:[%s496 + $0xc0] sm:$0xff]
      %v514 = vld [vmem:[%s496 + $0xc8] sm:$0xff]
      %v515 = vld [vmem:[%s496 + $0xd8] sm:$0xff]
      %v516 = vld [vmem:[%s496 + $0xe0] sm:$0xff]
      %v517 = vld [vmem:[%s496 + $0xf0] sm:$0xff]
      %v518 = vld [vmem:[%s496 + $0xf8] sm:$0xff]
      %v519 = vld [vmem:[%s496 + $0x108] sm:$0xff]
      %v520 = vld [vmem:[%s496 + $0x110] sm:$0xff]
      %v521 = vld [vmem:[%s496 + $0x120] sm:$0xff]
      %v522 = vld [vmem:[%s496 + $0x128] sm:$0xff]
      %v523 = vld [vmem:[%s496 + $0x138] sm:$0xff]
      %v524 = vld [vmem:[%s496 + $0x140] sm:$0xff]
      %v525 = vld [vmem:[%s496 + $0x150] sm:$0xff]
      %v526 = vld [vmem:[%s496 + $0x158] sm:$0xff]
      %v527 = vld [vmem:[%s496 + $0x168] sm:$0xff]
      %v528 = vld [vmem:[%s496 + $0x170] sm:$0xff]
      %v529 = vlaneseq
      %v530 = vshrl.u32 %v529, 7
      %v531 = vsub.s32 0, %v530
      %v532 = vrot.slane %v226, %v531
      %v533 = vmul.f32 %v497, %v532
      %v534 = vmul.f32 %v498, %v532
      %v535 = vmul.f32 %v499, %v532
      %v536 = vmul.f32 %v500, %v532
      %v537 = vmul.f32 %v501, %v532
      %v538 = vmul.f32 %v502, %v532
      %v539 = vmul.f32 %v503, %v532
      %v540 = vmul.f32 %v504, %v532
      %v541 = vmul.f32 %v505, %v532
      %v542 = vmul.f32 %v506, %v532
      %v543 = vmul.f32 %v507, %v532
      %v544 = vmul.f32 %v508, %v532
      %v545 = vmul.f32 %v509, %v532
      %v546 = vmul.f32 %v510, %v532
      %v547 = vmul.f32 %v511, %v532
      %v548 = vmul.f32 %v512, %v532
      %v549 = vmul.f32 %v513, %v532
      %v550 = vmul.f32 %v514, %v532
      %v551 = vmul.f32 %v515, %v532
      %v552 = vmul.f32 %v516, %v532
      %v553 = vmul.f32 %v517, %v532
      %v554 = vmul.f32 %v518, %v532
      %v555 = vmul.f32 %v519, %v532
      %v556 = vmul.f32 %v520, %v532
      %v557 = vmul.f32 %v521, %v532
      %v558 = vmul.f32 %v522, %v532
      %v559 = vmul.f32 %v523, %v532
      %v560 = vmul.f32 %v524, %v532
      %v561 = vmul.f32 %v525, %v532
      %v562 = vmul.f32 %v526, %v532
      %v563 = vmul.f32 %v527, %v532
      %v564 = vmul.f32 %v528, %v532
      %v565 = vadd.f32 %v464, %v533
      %v566 = vadd.f32 %v465, %v534
      %v567 = vadd.f32 %v466, %v535
      %v568 = vadd.f32 %v467, %v536
      %v569 = vadd.f32 %v468, %v537
      %v570 = vadd.f32 %v469, %v538
      %v571 = vadd.f32 %v470, %v539
      %v572 = vadd.f32 %v471, %v540
      %v573 = vadd.f32 %v472, %v541
      %v574 = vadd.f32 %v473, %v542
      %v575 = vadd.f32 %v474, %v543
      %v576 = vadd.f32 %v475, %v544
      %v577 = vadd.f32 %v476, %v545
      %v578 = vadd.f32 %v477, %v546
      %v579 = vadd.f32 %v478, %v547
      %v580 = vadd.f32 %v479, %v548
      %v581 = vadd.f32 %v480, %v549
      %v582 = vadd.f32 %v481, %v550
      %v583 = vadd.f32 %v482, %v551
      %v584 = vadd.f32 %v483, %v552
      %v585 = vadd.f32 %v484, %v553
      %v586 = vadd.f32 %v485, %v554
      %v587 = vadd.f32 %v486, %v555
      %v588 = vadd.f32 %v487, %v556
      %v589 = vadd.f32 %v488, %v557
      %v590 = vadd.f32 %v489, %v558
      %v591 = vadd.f32 %v490, %v559
      %v592 = vadd.f32 %v491, %v560
      %v593 = vadd.f32 %v492, %v561
      %v594 = vadd.f32 %v493, %v562
      %v595 = vadd.f32 %v494, %v563
      %v596 = vadd.f32 %v495, %v564
      %v597 = vld [vmem:[%s496 + $0x1] sm:$0xff]
      %v598 = vld [vmem:[%s496 + $0x9] sm:$0xff]
      %v599 = vld [vmem:[%s496 + $0x19] sm:$0xff]
      %v600 = vld [vmem:[%s496 + $0x21] sm:$0xff]
      %v601 = vld [vmem:[%s496 + $0x31] sm:$0xff]
      %v602 = vld [vmem:[%s496 + $0x39] sm:$0xff]
      %v603 = vld [vmem:[%s496 + $0x49] sm:$0xff]
      %v604 = vld [vmem:[%s496 + $0x51] sm:$0xff]
      %v605 = vld [vmem:[%s496 + $0x61] sm:$0xff]
      %v606 = vld [vmem:[%s496 + $0x69] sm:$0xff]
      %v607 = vld [vmem:[%s496 + $0x79] sm:$0xff]
      %v608 = vld [vmem:[%s496 + $0x81] sm:$0xff]
      %v609 = vld [vmem:[%s496 + $0x91] sm:$0xff]
      %v610 = vld [vmem:[%s496 + $0x99] sm:$0xff]
      %v611 = vld [vmem:[%s496 + $0xa9] sm:$0xff]
      %v612 = vld [vmem:[%s496 + $0xb1] sm:$0xff]
      %v613 = vld [vmem:[%s496 + $0xc1] sm:$0xff]
      %v614 = vld [vmem:[%s496 + $0xc9] sm:$0xff]
      %v615 = vld [vmem:[%s496 + $0xd9] sm:$0xff]
      %v616 = vld [vmem:[%s496 + $0xe1] sm:$0xff]
      %v617 = vld [vmem:[%s496 + $0xf1] sm:$0xff]
      %v618 = vld [vmem:[%s496 + $0xf9] sm:$0xff]
      %v619 = vld [vmem:[%s496 + $0x109] sm:$0xff]
      %v620 = vld [vmem:[%s496 + $0x111] sm:$0xff]
      %v621 = vld [vmem:[%s496 + $0x121] sm:$0xff]
      %v622 = vld [vmem:[%s496 + $0x129] sm:$0xff]
      %v623 = vld [vmem:[%s496 + $0x139] sm:$0xff]
      %v624 = vld [vmem:[%s496 + $0x141] sm:$0xff]
      %v625 = vld [vmem:[%s496 + $0x151] sm:$0xff]
      %v626 = vld [vmem:[%s496 + $0x159] sm:$0xff]
      %v627 = vld [vmem:[%s496 + $0x169] sm:$0xff]
      %v628 = vld [vmem:[%s496 + $0x171] sm:$0xff]
      %v629 = vlaneseq
      %v630 = vshrl.u32 %v629, 7
      %v631 = vsub.s32 1, %v630
      %v632 = vrot.slane %v226, %v631
      %v633 = vmul.f32 %v597, %v632
      %v634 = vmul.f32 %v598, %v632
      %v635 = vmul.f32 %v599, %v632
      %v636 = vmul.f32 %v600, %v632
      %v637 = vmul.f32 %v601, %v632
      %v638 = vmul.f32 %v602, %v632
      %v639 = vmul.f32 %v603, %v632
      %v640 = vmul.f32 %v604, %v632
      %v641 = vmul.f32 %v605, %v632
      %v642 = vmul.f32 %v606, %v632
      %v643 = vmul.f32 %v607, %v632
      %v644 = vmul.f32 %v608, %v632
      %v645 = vmul.f32 %v609, %v632
      %v646 = vmul.f32 %v610, %v632
      %v647 = vmul.f32 %v611, %v632
      %v648 = vmul.f32 %v612, %v632
      %v649 = vmul.f32 %v613, %v632
      %v650 = vmul.f32 %v614, %v632
      %v651 = vmul.f32 %v615, %v632
      %v652 = vmul.f32 %v616, %v632
      %v653 = vmul.f32 %v617, %v632
      %v654 = vmul.f32 %v618, %v632
      %v655 = vmul.f32 %v619, %v632
      %v656 = vmul.f32 %v620, %v632
      %v657 = vmul.f32 %v621, %v632
      %v658 = vmul.f32 %v622, %v632
      %v659 = vmul.f32 %v623, %v632
      %v660 = vmul.f32 %v624, %v632
      %v661 = vmul.f32 %v625, %v632
      %v662 = vmul.f32 %v626, %v632
      %v663 = vmul.f32 %v627, %v632
      %v664 = vmul.f32 %v628, %v632
      %v665 = vadd.f32 %v565, %v633
      %v666 = vadd.f32 %v566, %v634
      %v667 = vadd.f32 %v567, %v635
      %v668 = vadd.f32 %v568, %v636
      %v669 = vadd.f32 %v569, %v637
      %v670 = vadd.f32 %v570, %v638
      %v671 = vadd.f32 %v571, %v639
      %v672 = vadd.f32 %v572, %v640
      %v673 = vadd.f32 %v573, %v641
      %v674 = vadd.f32 %v574, %v642
      %v675 = vadd.f32 %v575, %v643
      %v676 = vadd.f32 %v576, %v644
      %v677 = vadd.f32 %v577, %v645
      %v678 = vadd.f32 %v578, %v646
      %v679 = vadd.f32 %v579, %v647
      %v680 = vadd.f32 %v580, %v648
      %v681 = vadd.f32 %v581, %v649
      %v682 = vadd.f32 %v582, %v650
      %v683 = vadd.f32 %v583, %v651
      %v684 = vadd.f32 %v584, %v652
      %v685 = vadd.f32 %v585, %v653
      %v686 = vadd.f32 %v586, %v654
      %v687 = vadd.f32 %v587, %v655
      %v688 = vadd.f32 %v588, %v656
      %v689 = vadd.f32 %v589, %v657
      %v690 = vadd.f32 %v590, %v658
      %v691 = vadd.f32 %v591, %v659
      %v692 = vadd.f32 %v592, %v660
      %v693 = vadd.f32 %v593, %v661
      %v694 = vadd.f32 %v594, %v662
      %v695 = vadd.f32 %v595, %v663
      %v696 = vadd.f32 %v596, %v664
      %v697 = vld [vmem:[%s496 + $0x2] sm:$0xff]
      %v698 = vld [vmem:[%s496 + $0xa] sm:$0xff]
      %v699 = vld [vmem:[%s496 + $0x1a] sm:$0xff]
      %v700 = vld [vmem:[%s496 + $0x22] sm:$0xff]
      %v701 = vld [vmem:[%s496 + $0x32] sm:$0xff]
      %v702 = vld [vmem:[%s496 + $0x3a] sm:$0xff]
      %v703 = vld [vmem:[%s496 + $0x4a] sm:$0xff]
      %v704 = vld [vmem:[%s496 + $0x52] sm:$0xff]
      %v705 = vld [vmem:[%s496 + $0x62] sm:$0xff]
      %v706 = vld [vmem:[%s496 + $0x6a] sm:$0xff]
      %v707 = vld [vmem:[%s496 + $0x7a] sm:$0xff]
      %v708 = vld [vmem:[%s496 + $0x82] sm:$0xff]
      %v709 = vld [vmem:[%s496 + $0x92] sm:$0xff]
      %v710 = vld [vmem:[%s496 + $0x9a] sm:$0xff]
      %v711 = vld [vmem:[%s496 + $0xaa] sm:$0xff]
      %v712 = vld [vmem:[%s496 + $0xb2] sm:$0xff]
      %v713 = vld [vmem:[%s496 + $0xc2] sm:$0xff]
      %v714 = vld [vmem:[%s496 + $0xca] sm:$0xff]
      %v715 = vld [vmem:[%s496 + $0xda] sm:$0xff]
      %v716 = vld [vmem:[%s496 + $0xe2] sm:$0xff]
      %v717 = vld [vmem:[%s496 + $0xf2] sm:$0xff]
      %v718 = vld [vmem:[%s496 + $0xfa] sm:$0xff]
      %v719 = vld [vmem:[%s496 + $0x10a] sm:$0xff]
      %v720 = vld [vmem:[%s496 + $0x112] sm:$0xff]
      %v721 = vld [vmem:[%s496 + $0x122] sm:$0xff]
      %v722 = vld [vmem:[%s496 + $0x12a] sm:$0xff]
      %v723 = vld [vmem:[%s496 + $0x13a] sm:$0xff]
      %v724 = vld [vmem:[%s496 + $0x142] sm:$0xff]
      %v725 = vld [vmem:[%s496 + $0x152] sm:$0xff]
      %v726 = vld [vmem:[%s496 + $0x15a] sm:$0xff]
      %v727 = vld [vmem:[%s496 + $0x16a] sm:$0xff]
      %v728 = vld [vmem:[%s496 + $0x172] sm:$0xff]
      %v729 = vlaneseq
      %v730 = vshrl.u32 %v729, 7
      %v731 = vsub.s32 2, %v730
      %v732 = vrot.slane %v226, %v731
      %v733 = vmul.f32 %v697, %v732
      %v734 = vmul.f32 %v698, %v732
      %v735 = vmul.f32 %v699, %v732
      %v736 = vmul.f32 %v700, %v732
      %v737 = vmul.f32 %v701, %v732
      %v738 = vmul.f32 %v702, %v732
      %v739 = vmul.f32 %v703, %v732
      %v740 = vmul.f32 %v704, %v732
      %v741 = vmul.f32 %v705, %v732
      %v742 = vmul.f32 %v706, %v732
      %v743 = vmul.f32 %v707, %v732
      %v744 = vmul.f32 %v708, %v732
      %v745 = vmul.f32 %v709, %v732
      %v746 = vmul.f32 %v710, %v732
      %v747 = vmul.f32 %v711, %v732
      %v748 = vmul.f32 %v712, %v732
      %v749 = vmul.f32 %v713, %v732
      %v750 = vmul.f32 %v714, %v732
      %v751 = vmul.f32 %v715, %v732
      %v752 = vmul.f32 %v716, %v732
      %v753 = vmul.f32 %v717, %v732
      %v754 = vmul.f32 %v718, %v732
      %v755 = vmul.f32 %v719, %v732
      %v756 = vmul.f32 %v720, %v732
      %v757 = vmul.f32 %v721, %v732
      %v758 = vmul.f32 %v722, %v732
      %v759 = vmul.f32 %v723, %v732
      %v760 = vmul.f32 %v724, %v732
      %v761 = vmul.f32 %v725, %v732
      %v762 = vmul.f32 %v726, %v732
      %v763 = vmul.f32 %v727, %v732
      %v764 = vmul.f32 %v728, %v732
      %v765 = vadd.f32 %v665, %v733
      %v766 = vadd.f32 %v666, %v734
      %v767 = vadd.f32 %v667, %v735
      %v768 = vadd.f32 %v668, %v736
      %v769 = vadd.f32 %v669, %v737
      %v770 = vadd.f32 %v670, %v738
      %v771 = vadd.f32 %v671, %v739
      %v772 = vadd.f32 %v672, %v740
      %v773 = vadd.f32 %v673, %v741
      %v774 = vadd.f32 %v674, %v742
      %v775 = vadd.f32 %v675, %v743
      %v776 = vadd.f32 %v676, %v744
      %v777 = vadd.f32 %v677, %v745
      %v778 = vadd.f32 %v678, %v746
      %v779 = vadd.f32 %v679, %v747
      %v780 = vadd.f32 %v680, %v748
      %v781 = vadd.f32 %v681, %v749
      %v782 = vadd.f32 %v682, %v750
      %v783 = vadd.f32 %v683, %v751
      %v784 = vadd.f32 %v684, %v752
      %v785 = vadd.f32 %v685, %v753
      %v786 = vadd.f32 %v686, %v754
      %v787 = vadd.f32 %v687, %v755
      %v788 = vadd.f32 %v688, %v756
      %v789 = vadd.f32 %v689, %v757
      %v790 = vadd.f32 %v690, %v758
      %v791 = vadd.f32 %v691, %v759
      %v792 = vadd.f32 %v692, %v760
      %v793 = vadd.f32 %v693, %v761
      %v794 = vadd.f32 %v694, %v762
      %v795 = vadd.f32 %v695, %v763
      %v796 = vadd.f32 %v696, %v764
      %s797 = scalar_lea.vmem %s219, 48
      %v798 = vld [vmem:[%s797] sm:$0xff]
      %v799 = vld [vmem:[%s797 + $0x8] sm:$0xff]
      %v800 = vld [vmem:[%s797 + $0x18] sm:$0xff]
      %v801 = vld [vmem:[%s797 + $0x20] sm:$0xff]
      %v802 = vld [vmem:[%s797 + $0x30] sm:$0xff]
      %v803 = vld [vmem:[%s797 + $0x38] sm:$0xff]
      %v804 = vld [vmem:[%s797 + $0x48] sm:$0xff]
      %v805 = vld [vmem:[%s797 + $0x50] sm:$0xff]
      %v806 = vld [vmem:[%s797 + $0x60] sm:$0xff]
      %v807 = vld [vmem:[%s797 + $0x68] sm:$0xff]
      %v808 = vld [vmem:[%s797 + $0x78] sm:$0xff]
      %v809 = vld [vmem:[%s797 + $0x80] sm:$0xff]
      %v810 = vld [vmem:[%s797 + $0x90] sm:$0xff]
      %v811 = vld [vmem:[%s797 + $0x98] sm:$0xff]
      %v812 = vld [vmem:[%s797 + $0xa8] sm:$0xff]
      %v813 = vld [vmem:[%s797 + $0xb0] sm:$0xff]
      %v814 = vld [vmem:[%s797 + $0xc0] sm:$0xff]
      %v815 = vld [vmem:[%s797 + $0xc8] sm:$0xff]
      %v816 = vld [vmem:[%s797 + $0xd8] sm:$0xff]
      %v817 = vld [vmem:[%s797 + $0xe0] sm:$0xff]
      %v818 = vld [vmem:[%s797 + $0xf0] sm:$0xff]
      %v819 = vld [vmem:[%s797 + $0xf8] sm:$0xff]
      %v820 = vld [vmem:[%s797 + $0x108] sm:$0xff]
      %v821 = vld [vmem:[%s797 + $0x110] sm:$0xff]
      %v822 = vld [vmem:[%s797 + $0x120] sm:$0xff]
      %v823 = vld [vmem:[%s797 + $0x128] sm:$0xff]
      %v824 = vld [vmem:[%s797 + $0x138] sm:$0xff]
      %v825 = vld [vmem:[%s797 + $0x140] sm:$0xff]
      %v826 = vld [vmem:[%s797 + $0x150] sm:$0xff]
      %v827 = vld [vmem:[%s797 + $0x158] sm:$0xff]
      %v828 = vld [vmem:[%s797 + $0x168] sm:$0xff]
      %v829 = vld [vmem:[%s797 + $0x170] sm:$0xff]
      %v830 = vlaneseq
      %v831 = vshrl.u32 %v830, 7
      %v832 = vsub.s32 0, %v831
      %v833 = vrot.slane %v227, %v832
      %v834 = vmul.f32 %v798, %v833
      %v835 = vmul.f32 %v799, %v833
      %v836 = vmul.f32 %v800, %v833
      %v837 = vmul.f32 %v801, %v833
      %v838 = vmul.f32 %v802, %v833
      %v839 = vmul.f32 %v803, %v833
      %v840 = vmul.f32 %v804, %v833
      %v841 = vmul.f32 %v805, %v833
      %v842 = vmul.f32 %v806, %v833
      %v843 = vmul.f32 %v807, %v833
      %v844 = vmul.f32 %v808, %v833
      %v845 = vmul.f32 %v809, %v833
      %v846 = vmul.f32 %v810, %v833
      %v847 = vmul.f32 %v811, %v833
      %v848 = vmul.f32 %v812, %v833
      %v849 = vmul.f32 %v813, %v833
      %v850 = vmul.f32 %v814, %v833
      %v851 = vmul.f32 %v815, %v833
      %v852 = vmul.f32 %v816, %v833
      %v853 = vmul.f32 %v817, %v833
      %v854 = vmul.f32 %v818, %v833
      %v855 = vmul.f32 %v819, %v833
      %v856 = vmul.f32 %v820, %v833
      %v857 = vmul.f32 %v821, %v833
      %v858 = vmul.f32 %v822, %v833
      %v859 = vmul.f32 %v823, %v833
      %v860 = vmul.f32 %v824, %v833
      %v861 = vmul.f32 %v825, %v833
      %v862 = vmul.f32 %v826, %v833
      %v863 = vmul.f32 %v827, %v833
      %v864 = vmul.f32 %v828, %v833
      %v865 = vmul.f32 %v829, %v833
      %v866 = vadd.f32 %v765, %v834
      %v867 = vadd.f32 %v766, %v835
      %v868 = vadd.f32 %v767, %v836
      %v869 = vadd.f32 %v768, %v837
      %v870 = vadd.f32 %v769, %v838
      %v871 = vadd.f32 %v770, %v839
      %v872 = vadd.f32 %v771, %v840
      %v873 = vadd.f32 %v772, %v841
      %v874 = vadd.f32 %v773, %v842
      %v875 = vadd.f32 %v774, %v843
      %v876 = vadd.f32 %v775, %v844
      %v877 = vadd.f32 %v776, %v845
      %v878 = vadd.f32 %v777, %v846
      %v879 = vadd.f32 %v778, %v847
      %v880 = vadd.f32 %v779, %v848
      %v881 = vadd.f32 %v780, %v849
      %v882 = vadd.f32 %v781, %v850
      %v883 = vadd.f32 %v782, %v851
      %v884 = vadd.f32 %v783, %v852
      %v885 = vadd.f32 %v784, %v853
      %v886 = vadd.f32 %v785, %v854
      %v887 = vadd.f32 %v786, %v855
      %v888 = vadd.f32 %v787, %v856
      %v889 = vadd.f32 %v788, %v857
      %v890 = vadd.f32 %v789, %v858
      %v891 = vadd.f32 %v790, %v859
      %v892 = vadd.f32 %v791, %v860
      %v893 = vadd.f32 %v792, %v861
      %v894 = vadd.f32 %v793, %v862
      %v895 = vadd.f32 %v794, %v863
      %v896 = vadd.f32 %v795, %v864
      %v897 = vadd.f32 %v796, %v865
      %v898 = vld [vmem:[%s797 + $0x1] sm:$0xff]
      %v899 = vld [vmem:[%s797 + $0x9] sm:$0xff]
      %v900 = vld [vmem:[%s797 + $0x19] sm:$0xff]
      %v901 = vld [vmem:[%s797 + $0x21] sm:$0xff]
      %v902 = vld [vmem:[%s797 + $0x31] sm:$0xff]
      %v903 = vld [vmem:[%s797 + $0x39] sm:$0xff]
      %v904 = vld [vmem:[%s797 + $0x49] sm:$0xff]
      %v905 = vld [vmem:[%s797 + $0x51] sm:$0xff]
      %v906 = vld [vmem:[%s797 + $0x61] sm:$0xff]
      %v907 = vld [vmem:[%s797 + $0x69] sm:$0xff]
      %v908 = vld [vmem:[%s797 + $0x79] sm:$0xff]
      %v909 = vld [vmem:[%s797 + $0x81] sm:$0xff]
      %v910 = vld [vmem:[%s797 + $0x91] sm:$0xff]
      %v911 = vld [vmem:[%s797 + $0x99] sm:$0xff]
      %v912 = vld [vmem:[%s797 + $0xa9] sm:$0xff]
      %v913 = vld [vmem:[%s797 + $0xb1] sm:$0xff]
      %v914 = vld [vmem:[%s797 + $0xc1] sm:$0xff]
      %v915 = vld [vmem:[%s797 + $0xc9] sm:$0xff]
      %v916 = vld [vmem:[%s797 + $0xd9] sm:$0xff]
      %v917 = vld [vmem:[%s797 + $0xe1] sm:$0xff]
      %v918 = vld [vmem:[%s797 + $0xf1] sm:$0xff]
      %v919 = vld [vmem:[%s797 + $0xf9] sm:$0xff]
      %v920 = vld [vmem:[%s797 + $0x109] sm:$0xff]
      %v921 = vld [vmem:[%s797 + $0x111] sm:$0xff]
      %v922 = vld [vmem:[%s797 + $0x121] sm:$0xff]
      %v923 = vld [vmem:[%s797 + $0x129] sm:$0xff]
      %v924 = vld [vmem:[%s797 + $0x139] sm:$0xff]
      %v925 = vld [vmem:[%s797 + $0x141] sm:$0xff]
      %v926 = vld [vmem:[%s797 + $0x151] sm:$0xff]
      %v927 = vld [vmem:[%s797 + $0x159] sm:$0xff]
      %v928 = vld [vmem:[%s797 + $0x169] sm:$0xff]
      %v929 = vld [vmem:[%s797 + $0x171] sm:$0xff]
      %v930 = vlaneseq
      %v931 = vshrl.u32 %v930, 7
      %v932 = vsub.s32 1, %v931
      %v933 = vrot.slane %v227, %v932
      %v934 = vmul.f32 %v898, %v933
      %v935 = vmul.f32 %v899, %v933
      %v936 = vmul.f32 %v900, %v933
      %v937 = vmul.f32 %v901, %v933
      %v938 = vmul.f32 %v902, %v933
      %v939 = vmul.f32 %v903, %v933
      %v940 = vmul.f32 %v904, %v933
      %v941 = vmul.f32 %v905, %v933
      %v942 = vmul.f32 %v906, %v933
      %v943 = vmul.f32 %v907, %v933
      %v944 = vmul.f32 %v908, %v933
      %v945 = vmul.f32 %v909, %v933
      %v946 = vmul.f32 %v910, %v933
      %v947 = vmul.f32 %v911, %v933
      %v948 = vmul.f32 %v912, %v933
      %v949 = vmul.f32 %v913, %v933
      %v950 = vmul.f32 %v914, %v933
      %v951 = vmul.f32 %v915, %v933
      %v952 = vmul.f32 %v916, %v933
      %v953 = vmul.f32 %v917, %v933
      %v954 = vmul.f32 %v918, %v933
      %v955 = vmul.f32 %v919, %v933
      %v956 = vmul.f32 %v920, %v933
      %v957 = vmul.f32 %v921, %v933
      %v958 = vmul.f32 %v922, %v933
      %v959 = vmul.f32 %v923, %v933
      %v960 = vmul.f32 %v924, %v933
      %v961 = vmul.f32 %v925, %v933
      %v962 = vmul.f32 %v926, %v933
      %v963 = vmul.f32 %v927, %v933
      %v964 = vmul.f32 %v928, %v933
      %v965 = vmul.f32 %v929, %v933
      %v966 = vadd.f32 %v866, %v934
      %v967 = vadd.f32 %v867, %v935
      %v968 = vadd.f32 %v868, %v936
      %v969 = vadd.f32 %v869, %v937
      %v970 = vadd.f32 %v870, %v938
      %v971 = vadd.f32 %v871, %v939
      %v972 = vadd.f32 %v872, %v940
      %v973 = vadd.f32 %v873, %v941
      %v974 = vadd.f32 %v874, %v942
      %v975 = vadd.f32 %v875, %v943
      %v976 = vadd.f32 %v876, %v944
      %v977 = vadd.f32 %v877, %v945
      %v978 = vadd.f32 %v878, %v946
      %v979 = vadd.f32 %v879, %v947
      %v980 = vadd.f32 %v880, %v948
      %v981 = vadd.f32 %v881, %v949
      %v982 = vadd.f32 %v882, %v950
      %v983 = vadd.f32 %v883, %v951
      %v984 = vadd.f32 %v884, %v952
      %v985 = vadd.f32 %v885, %v953
      %v986 = vadd.f32 %v886, %v954
      %v987 = vadd.f32 %v887, %v955
      %v988 = vadd.f32 %v888, %v956
      %v989 = vadd.f32 %v889, %v957
      %v990 = vadd.f32 %v890, %v958
      %v991 = vadd.f32 %v891, %v959
      %v992 = vadd.f32 %v892, %v960
      %v993 = vadd.f32 %v893, %v961
      %v994 = vadd.f32 %v894, %v962
      %v995 = vadd.f32 %v895, %v963
      %v996 = vadd.f32 %v896, %v964
      %v997 = vadd.f32 %v897, %v965
      %v998 = vld [vmem:[%s797 + $0x2] sm:$0xff]
      %v999 = vld [vmem:[%s797 + $0xa] sm:$0xff]
      %v1000 = vld [vmem:[%s797 + $0x1a] sm:$0xff]
      %v1001 = vld [vmem:[%s797 + $0x22] sm:$0xff]
      %v1002 = vld [vmem:[%s797 + $0x32] sm:$0xff]
      %v1003 = vld [vmem:[%s797 + $0x3a] sm:$0xff]
      %v1004 = vld [vmem:[%s797 + $0x4a] sm:$0xff]
      %v1005 = vld [vmem:[%s797 + $0x52] sm:$0xff]
      %v1006 = vld [vmem:[%s797 + $0x62] sm:$0xff]
      %v1007 = vld [vmem:[%s797 + $0x6a] sm:$0xff]
      %v1008 = vld [vmem:[%s797 + $0x7a] sm:$0xff]
      %v1009 = vld [vmem:[%s797 + $0x82] sm:$0xff]
      %v1010 = vld [vmem:[%s797 + $0x92] sm:$0xff]
      %v1011 = vld [vmem:[%s797 + $0x9a] sm:$0xff]
      %v1012 = vld [vmem:[%s797 + $0xaa] sm:$0xff]
      %v1013 = vld [vmem:[%s797 + $0xb2] sm:$0xff]
      %v1014 = vld [vmem:[%s797 + $0xc2] sm:$0xff]
      %v1015 = vld [vmem:[%s797 + $0xca] sm:$0xff]
      %v1016 = vld [vmem:[%s797 + $0xda] sm:$0xff]
      %v1017 = vld [vmem:[%s797 + $0xe2] sm:$0xff]
      %v1018 = vld [vmem:[%s797 + $0xf2] sm:$0xff]
      %v1019 = vld [vmem:[%s797 + $0xfa] sm:$0xff]
      %v1020 = vld [vmem:[%s797 + $0x10a] sm:$0xff]
      %v1021 = vld [vmem:[%s797 + $0x112] sm:$0xff]
      %v1022 = vld [vmem:[%s797 + $0x122] sm:$0xff]
      %v1023 = vld [vmem:[%s797 + $0x12a] sm:$0xff]
      %v1024 = vld [vmem:[%s797 + $0x13a] sm:$0xff]
      %v1025 = vld [vmem:[%s797 + $0x142] sm:$0xff]
      %v1026 = vld [vmem:[%s797 + $0x152] sm:$0xff]
      %v1027 = vld [vmem:[%s797 + $0x15a] sm:$0xff]
      %v1028 = vld [vmem:[%s797 + $0x16a] sm:$0xff]
      %v1029 = vld [vmem:[%s797 + $0x172] sm:$0xff]
      %v1030 = vlaneseq
      %v1031 = vshrl.u32 %v1030, 7
      %v1032 = vsub.s32 2, %v1031
      %v1033 = vrot.slane %v227, %v1032
      %v1034 = vmul.f32 %v998, %v1033
      %v1035 = vmul.f32 %v999, %v1033
      %v1036 = vmul.f32 %v1000, %v1033
      %v1037 = vmul.f32 %v1001, %v1033
      %v1038 = vmul.f32 %v1002, %v1033
      %v1039 = vmul.f32 %v1003, %v1033
      %v1040 = vmul.f32 %v1004, %v1033
      %v1041 = vmul.f32 %v1005, %v1033
      %v1042 = vmul.f32 %v1006, %v1033
      %v1043 = vmul.f32 %v1007, %v1033
      %v1044 = vmul.f32 %v1008, %v1033
      %v1045 = vmul.f32 %v1009, %v1033
      %v1046 = vmul.f32 %v1010, %v1033
      %v1047 = vmul.f32 %v1011, %v1033
      %v1048 = vmul.f32 %v1012, %v1033
      %v1049 = vmul.f32 %v1013, %v1033
      %v1050 = vmul.f32 %v1014, %v1033
      %v1051 = vmul.f32 %v1015, %v1033
      %v1052 = vmul.f32 %v1016, %v1033
      %v1053 = vmul.f32 %v1017, %v1033
      %v1054 = vmul.f32 %v1018, %v1033
      %v1055 = vmul.f32 %v1019, %v1033
      %v1056 = vmul.f32 %v1020, %v1033
      %v1057 = vmul.f32 %v1021, %v1033
      %v1058 = vmul.f32 %v1022, %v1033
      %v1059 = vmul.f32 %v1023, %v1033
      %v1060 = vmul.f32 %v1024, %v1033
      %v1061 = vmul.f32 %v1025, %v1033
      %v1062 = vmul.f32 %v1026, %v1033
      %v1063 = vmul.f32 %v1027, %v1033
      %v1064 = vmul.f32 %v1028, %v1033
      %v1065 = vmul.f32 %v1029, %v1033
      %v1066 = vadd.f32 %v966, %v1034
      %v1067 = vadd.f32 %v967, %v1035
      %v1068 = vadd.f32 %v968, %v1036
      %v1069 = vadd.f32 %v969, %v1037
      %v1070 = vadd.f32 %v970, %v1038
      %v1071 = vadd.f32 %v971, %v1039
      %v1072 = vadd.f32 %v972, %v1040
      %v1073 = vadd.f32 %v973, %v1041
      %v1074 = vadd.f32 %v974, %v1042
      %v1075 = vadd.f32 %v975, %v1043
      %v1076 = vadd.f32 %v976, %v1044
      %v1077 = vadd.f32 %v977, %v1045
      %v1078 = vadd.f32 %v978, %v1046
      %v1079 = vadd.f32 %v979, %v1047
      %v1080 = vadd.f32 %v980, %v1048
      %v1081 = vadd.f32 %v981, %v1049
      %v1082 = vadd.f32 %v982, %v1050
      %v1083 = vadd.f32 %v983, %v1051
      %v1084 = vadd.f32 %v984, %v1052
      %v1085 = vadd.f32 %v985, %v1053
      %v1086 = vadd.f32 %v986, %v1054
      %v1087 = vadd.f32 %v987, %v1055
      %v1088 = vadd.f32 %v988, %v1056
      %v1089 = vadd.f32 %v989, %v1057
      %v1090 = vadd.f32 %v990, %v1058
      %v1091 = vadd.f32 %v991, %v1059
      %v1092 = vadd.f32 %v992, %v1060
      %v1093 = vadd.f32 %v993, %v1061
      %v1094 = vadd.f32 %v994, %v1062
      %v1095 = vadd.f32 %v995, %v1063
      %v1096 = vadd.f32 %v996, %v1064
      %v1097 = vadd.f32 %v997, %v1065
      %v1098 = vld [vmem:[%s2] sm:$0x1]
      %v1100 = vlaneseq
      %v1101 = vshrl.u32 %v1100, 7
      %v1102 = vsub.s32 0, %v1101
      %v1103 = vrot.slane %v1098, %v1102
      %v1105 = vadd.f32 %v1066, %v1103
      %v1106 = vadd.f32 %v1067, %v1103
      %v1107 = vadd.f32 %v1068, %v1103
      %v1108 = vadd.f32 %v1069, %v1103
      %v1109 = vadd.f32 %v1070, %v1103
      %v1110 = vadd.f32 %v1071, %v1103
      %v1111 = vadd.f32 %v1072, %v1103
      %v1112 = vadd.f32 %v1073, %v1103
      %v1113 = vadd.f32 %v1074, %v1103
      %v1114 = vadd.f32 %v1075, %v1103
      %v1115 = vadd.f32 %v1076, %v1103
      %v1116 = vadd.f32 %v1077, %v1103
      %v1117 = vadd.f32 %v1078, %v1103
      %v1118 = vadd.f32 %v1079, %v1103
      %v1119 = vadd.f32 %v1080, %v1103
      %v1120 = vadd.f32 %v1081, %v1103
      %v1121 = vadd.f32 %v1082, %v1103
      %v1122 = vadd.f32 %v1083, %v1103
      %v1123 = vadd.f32 %v1084, %v1103
      %v1124 = vadd.f32 %v1085, %v1103
      %v1125 = vadd.f32 %v1086, %v1103
      %v1126 = vadd.f32 %v1087, %v1103
      %v1127 = vadd.f32 %v1088, %v1103
      %v1128 = vadd.f32 %v1089, %v1103
      %v1129 = vadd.f32 %v1090, %v1103
      %v1130 = vadd.f32 %v1091, %v1103
      %v1131 = vadd.f32 %v1092, %v1103
      %v1132 = vadd.f32 %v1093, %v1103
      %v1133 = vadd.f32 %v1094, %v1103
      %v1134 = vadd.f32 %v1095, %v1103
      %v1135 = vadd.f32 %v1096, %v1103
      %v1136 = vadd.f32 %v1097, %v1103
      %v1137 = vmax.f32 %v1105, 0.0
      %v1138 = vmax.f32 %v1106, 0.0
      %v1139 = vmax.f32 %v1107, 0.0
      %v1140 = vmax.f32 %v1108, 0.0
      %v1141 = vmax.f32 %v1109, 0.0
      %v1142 = vmax.f32 %v1110, 0.0
      %v1143 = vmax.f32 %v1111, 0.0
      %v1144 = vmax.f32 %v1112, 0.0
      %v1145 = vmax.f32 %v1113, 0.0
      %v1146 = vmax.f32 %v1114, 0.0
      %v1147 = vmax.f32 %v1115, 0.0
      %v1148 = vmax.f32 %v1116, 0.0
      %v1149 = vmax.f32 %v1117, 0.0
      %v1150 = vmax.f32 %v1118, 0.0
      %v1151 = vmax.f32 %v1119, 0.0
      %v1152 = vmax.f32 %v1120, 0.0
      %v1153 = vmax.f32 %v1121, 0.0
      %v1154 = vmax.f32 %v1122, 0.0
      %v1155 = vmax.f32 %v1123, 0.0
      %v1156 = vmax.f32 %v1124, 0.0
      %v1157 = vmax.f32 %v1125, 0.0
      %v1158 = vmax.f32 %v1126, 0.0
      %v1159 = vmax.f32 %v1127, 0.0
      %v1160 = vmax.f32 %v1128, 0.0
      %v1161 = vmax.f32 %v1129, 0.0
      %v1162 = vmax.f32 %v1130, 0.0
      %v1163 = vmax.f32 %v1131, 0.0
      %v1164 = vmax.f32 %v1132, 0.0
      %v1165 = vmax.f32 %v1133, 0.0
      %v1166 = vmax.f32 %v1134, 0.0
      %v1167 = vmax.f32 %v1135, 0.0
      %v1168 = vmax.f32 %v1136, 0.0
      %v1169 = vld [vmem:[%s3] sm:$0x7]
      %1171 = vset.pattern.permute.xlu0 0
      %1172 = vperm.xlu0 %1171, %v1137
      %v1173 = vpop.permute.xlu0 %1172
      %1176 = vset.pattern.permute.xlu0 0
      %1177 = vperm.xlu0 %1176, %v1138
      %v1178 = vpop.permute.xlu0 %1177
      %1181 = vset.pattern.permute.xlu0 0
      %1182 = vperm.xlu0 %1181, %v1139
      %v1183 = vpop.permute.xlu0 %1182
      %1186 = vset.pattern.permute.xlu0 0
      %1187 = vperm.xlu0 %1186, %v1140
      %v1188 = vpop.permute.xlu0 %1187
      %1191 = vset.pattern.permute.xlu0 0
      %1192 = vperm.xlu0 %1191, %v1141
      %v1193 = vpop.permute.xlu0 %1192
      %1196 = vset.pattern.permute.xlu0 0
      %1197 = vperm.xlu0 %1196, %v1142
      %v1198 = vpop.permute.xlu0 %1197
      %1201 = vset.pattern.permute.xlu0 0
      %1202 = vperm.xlu0 %1201, %v1143
      %v1203 = vpop.permute.xlu0 %1202
      %1206 = vset.pattern.permute.xlu0 0
      %1207 = vperm.xlu0 %1206, %v1144
      %v1208 = vpop.permute.xlu0 %1207
      %1211 = vset.pattern.permute.xlu0 0
      %1212 = vperm.xlu0 %1211, %v1145
      %v1213 = vpop.permute.xlu0 %1212
      %1216 = vset.pattern.permute.xlu0 0
      %1217 = vperm.xlu0 %1216, %v1146
      %v1218 = vpop.permute.xlu0 %1217
      %1221 = vset.pattern.permute.xlu0 0
      %1222 = vperm.xlu0 %1221, %v1147
      %v1223 = vpop.permute.xlu0 %1222
      %1226 = vset.pattern.permute.xlu0 0
      %1227 = vperm.xlu0 %1226, %v1148
      %v1228 = vpop.permute.xlu0 %1227
      %1231 = vset.pattern.permute.xlu0 0
      %1232 = vperm.xlu0 %1231, %v1149
      %v1233 = vpop.permute.xlu0 %1232
      %1236 = vset.pattern.permute.xlu0 0
      %1237 = vperm.xlu0 %1236, %v1150
      %v1238 = vpop.permute.xlu0 %1237
      %1241 = vset.pattern.permute.xlu0 0
      %1242 = vperm.xlu0 %1241, %v1151
      %v1243 = vpop.permute.xlu0 %1242
      %1246 = vset.pattern.permute.xlu0 0
      %1247 = vperm.xlu0 %1246, %v1152
      %v1248 = vpop.permute.xlu0 %1247
      %1251 = vset.pattern.permute.xlu0 0
      %1252 = vperm.xlu0 %1251, %v1153
      %v1253 = vpop.permute.xlu0 %1252
      %1256 = vset.pattern.permute.xlu0 0
      %1257 = vperm.xlu0 %1256, %v1154
      %v1258 = vpop.permute.xlu0 %1257
      %1261 = vset.pattern.permute.xlu0 0
      %1262 = vperm.xlu0 %1261, %v1155
      %v1263 = vpop.permute.xlu0 %1262
      %1266 = vset.pattern.permute.xlu0 0
      %1267 = vperm.xlu0 %1266, %v1156
      %v1268 = vpop.permute.xlu0 %1267
      %1271 = vset.pattern.permute.xlu0 0
      %1272 = vperm.xlu0 %1271, %v1157
      %v1273 = vpop.permute.xlu0 %1272
      %1276 = vset.pattern.permute.xlu0 0
      %1277 = vperm.xlu0 %1276, %v1158
      %v1278 = vpop.permute.xlu0 %1277
      %1281 = vset.pattern.permute.xlu0 0
      %1282 = vperm.xlu0 %1281, %v1159
      %v1283 = vpop.permute.xlu0 %1282
      %1286 = vset.pattern.permute.xlu0 0
      %1287 = vperm.xlu0 %1286, %v1160
      %v1288 = vpop.permute.xlu0 %1287
      %1291 = vset.pattern.permute.xlu0 0
      %1292 = vperm.xlu0 %1291, %v1161
      %v1293 = vpop.permute.xlu0 %1292
      %1296 = vset.pattern.permute.xlu0 0
      %1297 = vperm.xlu0 %1296, %v1162
      %v1298 = vpop.permute.xlu0 %1297
      %1301 = vset.pattern.permute.xlu0 0
      %1302 = vperm.xlu0 %1301, %v1163
      %v1303 = vpop.permute.xlu0 %1302
      %1306 = vset.pattern.permute.xlu0 0
      %1307 = vperm.xlu0 %1306, %v1164
      %v1308 = vpop.permute.xlu0 %1307
      %1311 = vset.pattern.permute.xlu0 0
      %1312 = vperm.xlu0 %1311, %v1165
      %v1313 = vpop.permute.xlu0 %1312
      %1316 = vset.pattern.permute.xlu0 0
      %1317 = vperm.xlu0 %1316, %v1166
      %v1318 = vpop.permute.xlu0 %1317
      %1321 = vset.pattern.permute.xlu0 0
      %1322 = vperm.xlu0 %1321, %v1167
      %v1323 = vpop.permute.xlu0 %1322
      %1326 = vset.pattern.permute.xlu0 0
      %1327 = vperm.xlu0 %1326, %v1168
      %v1328 = vpop.permute.xlu0 %1327
      %v1330 = vlaneseq
      %v1331 = vshrl.u32 %v1330, 7
      %v1332 = vsub.s32 0, %v1331
      %v1333 = vrot.slane %v1169, %v1332
      %v1334 = vmul.f32 %v1173, %v1333
      %v1335 = vmul.f32 %v1178, %v1333
      %v1336 = vmul.f32 %v1183, %v1333
      %v1337 = vmul.f32 %v1188, %v1333
      %v1338 = vmul.f32 %v1193, %v1333
      %v1339 = vmul.f32 %v1198, %v1333
      %v1340 = vmul.f32 %v1203, %v1333
      %v1341 = vmul.f32 %v1208, %v1333
      %v1342 = vmul.f32 %v1213, %v1333
      %v1343 = vmul.f32 %v1218, %v1333
      %v1344 = vmul.f32 %v1223, %v1333
      %v1345 = vmul.f32 %v1228, %v1333
      %v1346 = vmul.f32 %v1233, %v1333
      %v1347 = vmul.f32 %v1238, %v1333
      %v1348 = vmul.f32 %v1243, %v1333
      %v1349 = vmul.f32 %v1248, %v1333
      %v1350 = vmul.f32 %v1253, %v1333
      %v1351 = vmul.f32 %v1258, %v1333
      %v1352 = vmul.f32 %v1263, %v1333
      %v1353 = vmul.f32 %v1268, %v1333
      %v1354 = vmul.f32 %v1273, %v1333
      %v1355 = vmul.f32 %v1278, %v1333
      %v1356 = vmul.f32 %v1283, %v1333
      %v1357 = vmul.f32 %v1288, %v1333
      %v1358 = vmul.f32 %v1293, %v1333
      %v1359 = vmul.f32 %v1298, %v1333
      %v1360 = vmul.f32 %v1303, %v1333
      %v1361 = vmul.f32 %v1308, %v1333
      %v1362 = vmul.f32 %v1313, %v1333
      %v1363 = vmul.f32 %v1318, %v1333
      %v1364 = vmul.f32 %v1323, %v1333
      %v1365 = vmul.f32 %v1328, %v1333
      %1366 = vset.pattern.permute.xlu0 1
      %1367 = vperm.xlu0 %1366, %v1137
      %v1368 = vpop.permute.xlu0 %1367
      %1370 = vset.pattern.permute.xlu0 1
      %1371 = vperm.xlu0 %1370, %v1138
      %v1372 = vpop.permute.xlu0 %1371
      %1374 = vset.pattern.permute.xlu0 1
      %1375 = vperm.xlu0 %1374, %v1139
      %v1376 = vpop.permute.xlu0 %1375
      %1378 = vset.pattern.permute.xlu0 1
      %1379 = vperm.xlu0 %1378, %v1140
      %v1380 = vpop.permute.xlu0 %1379
      %1382 = vset.pattern.permute.xlu0 1
      %1383 = vperm.xlu0 %1382, %v1141
      %v1384 = vpop.permute.xlu0 %1383
      %1386 = vset.pattern.permute.xlu0 1
      %1387 = vperm.xlu0 %1386, %v1142
      %v1388 = vpop.permute.xlu0 %1387
      %1390 = vset.pattern.permute.xlu0 1
      %1391 = vperm.xlu0 %1390, %v1143
      %v1392 = vpop.permute.xlu0 %1391
      %1394 = vset.pattern.permute.xlu0 1
      %1395 = vperm.xlu0 %1394, %v1144
      %v1396 = vpop.permute.xlu0 %1395
      %1398 = vset.pattern.permute.xlu0 1
      %1399 = vperm.xlu0 %1398, %v1145
      %v1400 = vpop.permute.xlu0 %1399
      %1402 = vset.pattern.permute.xlu0 1
      %1403 = vperm.xlu0 %1402, %v1146
      %v1404 = vpop.permute.xlu0 %1403
      %1406 = vset.pattern.permute.xlu0 1
      %1407 = vperm.xlu0 %1406, %v1147
      %v1408 = vpop.permute.xlu0 %1407
      %1410 = vset.pattern.permute.xlu0 1
      %1411 = vperm.xlu0 %1410, %v1148
      %v1412 = vpop.permute.xlu0 %1411
      %1414 = vset.pattern.permute.xlu0 1
      %1415 = vperm.xlu0 %1414, %v1149
      %v1416 = vpop.permute.xlu0 %1415
      %1418 = vset.pattern.permute.xlu0 1
      %1419 = vperm.xlu0 %1418, %v1150
      %v1420 = vpop.permute.xlu0 %1419
      %1422 = vset.pattern.permute.xlu0 1
      %1423 = vperm.xlu0 %1422, %v1151
      %v1424 = vpop.permute.xlu0 %1423
      %1426 = vset.pattern.permute.xlu0 1
      %1427 = vperm.xlu0 %1426, %v1152
      %v1428 = vpop.permute.xlu0 %1427
      %1430 = vset.pattern.permute.xlu0 1
      %1431 = vperm.xlu0 %1430, %v1153
      %v1432 = vpop.permute.xlu0 %1431
      %1434 = vset.pattern.permute.xlu0 1
      %1435 = vperm.xlu0 %1434, %v1154
      %v1436 = vpop.permute.xlu0 %1435
      %1438 = vset.pattern.permute.xlu0 1
      %1439 = vperm.xlu0 %1438, %v1155
      %v1440 = vpop.permute.xlu0 %1439
      %1442 = vset.pattern.permute.xlu0 1
      %1443 = vperm.xlu0 %1442, %v1156
      %v1444 = vpop.permute.xlu0 %1443
      %1446 = vset.pattern.permute.xlu0 1
      %1447 = vperm.xlu0 %1446, %v1157
      %v1448 = vpop.permute.xlu0 %1447
      %1450 = vset.pattern.permute.xlu0 1
      %1451 = vperm.xlu0 %1450, %v1158
      %v1452 = vpop.permute.xlu0 %1451
      %1454 = vset.pattern.permute.xlu0 1
      %1455 = vperm.xlu0 %1454, %v1159
      %v1456 = vpop.permute.xlu0 %1455
      %1458 = vset.pattern.permute.xlu0 1
      %1459 = vperm.xlu0 %1458, %v1160
      %v1460 = vpop.permute.xlu0 %1459
      %1462 = vset.pattern.permute.xlu0 1
      %1463 = vperm.xlu0 %1462, %v1161
      %v1464 = vpop.permute.xlu0 %1463
      %1466 = vset.pattern.permute.xlu0 1
      %1467 = vperm.xlu0 %1466, %v1162
      %v1468 = vpop.permute.xlu0 %1467
      %1470 = vset.pattern.permute.xlu0 1
      %1471 = vperm.xlu0 %1470, %v1163
      %v1472 = vpop.permute.xlu0 %1471
      %1474 = vset.pattern.permute.xlu0 1
      %1475 = vperm.xlu0 %1474, %v1164
      %v1476 = vpop.permute.xlu0 %1475
      %1478 = vset.pattern.permute.xlu0 1
      %1479 = vperm.xlu0 %1478, %v1165
      %v1480 = vpop.permute.xlu0 %1479
      %1482 = vset.pattern.permute.xlu0 1
      %1483 = vperm.xlu0 %1482, %v1166
      %v1484 = vpop.permute.xlu0 %1483
      %1486 = vset.pattern.permute.xlu0 1
      %1487 = vperm.xlu0 %1486, %v1167
      %v1488 = vpop.permute.xlu0 %1487
      %1490 = vset.pattern.permute.xlu0 1
      %1491 = vperm.xlu0 %1490, %v1168
      %v1492 = vpop.permute.xlu0 %1491
      %v1494 = vlaneseq
      %v1495 = vshrl.u32 %v1494, 7
      %v1496 = vsub.s32 1, %v1495
      %v1497 = vrot.slane %v1169, %v1496
      %v1498 = vmul.f32 %v1368, %v1497
      %v1499 = vmul.f32 %v1372, %v1497
      %v1500 = vmul.f32 %v1376, %v1497
      %v1501 = vmul.f32 %v1380, %v1497
      %v1502 = vmul.f32 %v1384, %v1497
      %v1503 = vmul.f32 %v1388, %v1497
      %v1504 = vmul.f32 %v1392, %v1497
      %v1505 = vmul.f32 %v1396, %v1497
      %v1506 = vmul.f32 %v1400, %v1497
      %v1507 = vmul.f32 %v1404, %v1497
      %v1508 = vmul.f32 %v1408, %v1497
      %v1509 = vmul.f32 %v1412, %v1497
      %v1510 = vmul.f32 %v1416, %v1497
      %v1511 = vmul.f32 %v1420, %v1497
      %v1512 = vmul.f32 %v1424, %v1497
      %v1513 = vmul.f32 %v1428, %v1497
      %v1514 = vmul.f32 %v1432, %v1497
      %v1515 = vmul.f32 %v1436, %v1497
      %v1516 = vmul.f32 %v1440, %v1497
      %v1517 = vmul.f32 %v1444, %v1497
      %v1518 = vmul.f32 %v1448, %v1497
      %v1519 = vmul.f32 %v1452, %v1497
      %v1520 = vmul.f32 %v1456, %v1497
      %v1521 = vmul.f32 %v1460, %v1497
      %v1522 = vmul.f32 %v1464, %v1497
      %v1523 = vmul.f32 %v1468, %v1497
      %v1524 = vmul.f32 %v1472, %v1497
      %v1525 = vmul.f32 %v1476, %v1497
      %v1526 = vmul.f32 %v1480, %v1497
      %v1527 = vmul.f32 %v1484, %v1497
      %v1528 = vmul.f32 %v1488, %v1497
      %v1529 = vmul.f32 %v1492, %v1497
      %v1530 = vadd.f32 %v1334, %v1498
      %v1531 = vadd.f32 %v1335, %v1499
      %v1532 = vadd.f32 %v1336, %v1500
      %v1533 = vadd.f32 %v1337, %v1501
      %v1534 = vadd.f32 %v1338, %v1502
      %v1535 = vadd.f32 %v1339, %v1503
      %v1536 = vadd.f32 %v1340, %v1504
      %v1537 = vadd.f32 %v1341, %v1505
      %v1538 = vadd.f32 %v1342, %v1506
      %v1539 = vadd.f32 %v1343, %v1507
      %v1540 = vadd.f32 %v1344, %v1508
      %v1541 = vadd.f32 %v1345, %v1509
      %v1542 = vadd.f32 %v1346, %v1510
      %v1543 = vadd.f32 %v1347, %v1511
      %v1544 = vadd.f32 %v1348, %v1512
      %v1545 = vadd.f32 %v1349, %v1513
      %v1546 = vadd.f32 %v1350, %v1514
      %v1547 = vadd.f32 %v1351, %v1515
      %v1548 = vadd.f32 %v1352, %v1516
      %v1549 = vadd.f32 %v1353, %v1517
      %v1550 = vadd.f32 %v1354, %v1518
      %v1551 = vadd.f32 %v1355, %v1519
      %v1552 = vadd.f32 %v1356, %v1520
      %v1553 = vadd.f32 %v1357, %v1521
      %v1554 = vadd.f32 %v1358, %v1522
      %v1555 = vadd.f32 %v1359, %v1523
      %v1556 = vadd.f32 %v1360, %v1524
      %v1557 = vadd.f32 %v1361, %v1525
      %v1558 = vadd.f32 %v1362, %v1526
      %v1559 = vadd.f32 %v1363, %v1527
      %v1560 = vadd.f32 %v1364, %v1528
      %v1561 = vadd.f32 %v1365, %v1529
      %1562 = vset.pattern.permute.xlu0 2
      %1563 = vperm.xlu0 %1562, %v1137
      %v1564 = vpop.permute.xlu0 %1563
      %1566 = vset.pattern.permute.xlu0 2
      %1567 = vperm.xlu0 %1566, %v1138
      %v1568 = vpop.permute.xlu0 %1567
      %1570 = vset.pattern.permute.xlu0 2
      %1571 = vperm.xlu0 %1570, %v1139
      %v1572 = vpop.permute.xlu0 %1571
      %1574 = vset.pattern.permute.xlu0 2
      %1575 = vperm.xlu0 %1574, %v1140
      %v1576 = vpop.permute.xlu0 %1575
      %1578 = vset.pattern.permute.xlu0 2
      %1579 = vperm.xlu0 %1578, %v1141
      %v1580 = vpop.permute.xlu0 %1579
      %1582 = vset.pattern.permute.xlu0 2
      %1583 = vperm.xlu0 %1582, %v1142
      %v1584 = vpop.permute.xlu0 %1583
      %1586 = vset.pattern.permute.xlu0 2
      %1587 = vperm.xlu0 %1586, %v1143
      %v1588 = vpop.permute.xlu0 %1587
      %1590 = vset.pattern.permute.xlu0 2
      %1591 = vperm.xlu0 %1590, %v1144
      %v1592 = vpop.permute.xlu0 %1591
      %1594 = vset.pattern.permute.xlu0 2
      %1595 = vperm.xlu0 %1594, %v1145
      %v1596 = vpop.permute.xlu0 %1595
      %1598 = vset.pattern.permute.xlu0 2
      %1599 = vperm.xlu0 %1598, %v1146
      %v1600 = vpop.permute.xlu0 %1599
      %1602 = vset.pattern.permute.xlu0 2
      %1603 = vperm.xlu0 %1602, %v1147
      %v1604 = vpop.permute.xlu0 %1603
      %1606 = vset.pattern.permute.xlu0 2
      %1607 = vperm.xlu0 %1606, %v1148
      %v1608 = vpop.permute.xlu0 %1607
      %1610 = vset.pattern.permute.xlu0 2
      %1611 = vperm.xlu0 %1610, %v1149
      %v1612 = vpop.permute.xlu0 %1611
      %1614 = vset.pattern.permute.xlu0 2
      %1615 = vperm.xlu0 %1614, %v1150
      %v1616 = vpop.permute.xlu0 %1615
      %1618 = vset.pattern.permute.xlu0 2
      %1619 = vperm.xlu0 %1618, %v1151
      %v1620 = vpop.permute.xlu0 %1619
      %1622 = vset.pattern.permute.xlu0 2
      %1623 = vperm.xlu0 %1622, %v1152
      %v1624 = vpop.permute.xlu0 %1623
      %1626 = vset.pattern.permute.xlu0 2
      %1627 = vperm.xlu0 %1626, %v1153
      %v1628 = vpop.permute.xlu0 %1627
      %1630 = vset.pattern.permute.xlu0 2
      %1631 = vperm.xlu0 %1630, %v1154
      %v1632 = vpop.permute.xlu0 %1631
      %1634 = vset.pattern.permute.xlu0 2
      %1635 = vperm.xlu0 %1634, %v1155
      %v1636 = vpop.permute.xlu0 %1635
      %1638 = vset.pattern.permute.xlu0 2
      %1639 = vperm.xlu0 %1638, %v1156
      %v1640 = vpop.permute.xlu0 %1639
      %1642 = vset.pattern.permute.xlu0 2
      %1643 = vperm.xlu0 %1642, %v1157
      %v1644 = vpop.permute.xlu0 %1643
      %1646 = vset.pattern.permute.xlu0 2
      %1647 = vperm.xlu0 %1646, %v1158
      %v1648 = vpop.permute.xlu0 %1647
      %1650 = vset.pattern.permute.xlu0 2
      %1651 = vperm.xlu0 %1650, %v1159
      %v1652 = vpop.permute.xlu0 %1651
      %1654 = vset.pattern.permute.xlu0 2
      %1655 = vperm.xlu0 %1654, %v1160
      %v1656 = vpop.permute.xlu0 %1655
      %1658 = vset.pattern.permute.xlu0 2
      %1659 = vperm.xlu0 %1658, %v1161
      %v1660 = vpop.permute.xlu0 %1659
      %1662 = vset.pattern.permute.xlu0 2
      %1663 = vperm.xlu0 %1662, %v1162
      %v1664 = vpop.permute.xlu0 %1663
      %1666 = vset.pattern.permute.xlu0 2
      %1667 = vperm.xlu0 %1666, %v1163
      %v1668 = vpop.permute.xlu0 %1667
      %1670 = vset.pattern.permute.xlu0 2
      %1671 = vperm.xlu0 %1670, %v1164
      %v1672 = vpop.permute.xlu0 %1671
      %1674 = vset.pattern.permute.xlu0 2
      %1675 = vperm.xlu0 %1674, %v1165
      %v1676 = vpop.permute.xlu0 %1675
      %1678 = vset.pattern.permute.xlu0 2
      %1679 = vperm.xlu0 %1678, %v1166
      %v1680 = vpop.permute.xlu0 %1679
      %1682 = vset.pattern.permute.xlu0 2
      %1683 = vperm.xlu0 %1682, %v1167
      %v1684 = vpop.permute.xlu0 %1683
      %1686 = vset.pattern.permute.xlu0 2
      %1687 = vperm.xlu0 %1686, %v1168
      %v1688 = vpop.permute.xlu0 %1687
      %v1690 = vlaneseq
      %v1691 = vshrl.u32 %v1690, 7
      %v1692 = vsub.s32 2, %v1691
      %v1693 = vrot.slane %v1169, %v1692
      %v1694 = vmul.f32 %v1564, %v1693
      %v1695 = vmul.f32 %v1568, %v1693
      %v1696 = vmul.f32 %v1572, %v1693
      %v1697 = vmul.f32 %v1576, %v1693
      %v1698 = vmul.f32 %v1580, %v1693
      %v1699 = vmul.f32 %v1584, %v1693
      %v1700 = vmul.f32 %v1588, %v1693
      %v1701 = vmul.f32 %v1592, %v1693
      %v1702 = vmul.f32 %v1596, %v1693
      %v1703 = vmul.f32 %v1600, %v1693
      %v1704 = vmul.f32 %v1604, %v1693
      %v1705 = vmul.f32 %v1608, %v1693
      %v1706 = vmul.f32 %v1612, %v1693
      %v1707 = vmul.f32 %v1616, %v1693
      %v1708 = vmul.f32 %v1620, %v1693
      %v1709 = vmul.f32 %v1624, %v1693
      %v1710 = vmul.f32 %v1628, %v1693
      %v1711 = vmul.f32 %v1632, %v1693
      %v1712 = vmul.f32 %v1636, %v1693
      %v1713 = vmul.f32 %v1640, %v1693
      %v1714 = vmul.f32 %v1644, %v1693
      %v1715 = vmul.f32 %v1648, %v1693
      %v1716 = vmul.f32 %v1652, %v1693
      %v1717 = vmul.f32 %v1656, %v1693
      %v1718 = vmul.f32 %v1660, %v1693
      %v1719 = vmul.f32 %v1664, %v1693
      %v1720 = vmul.f32 %v1668, %v1693
      %v1721 = vmul.f32 %v1672, %v1693
      %v1722 = vmul.f32 %v1676, %v1693
      %v1723 = vmul.f32 %v1680, %v1693
      %v1724 = vmul.f32 %v1684, %v1693
      %v1725 = vmul.f32 %v1688, %v1693
      %v1726 = vadd.f32 %v1530, %v1694
      %v1727 = vadd.f32 %v1531, %v1695
      %v1728 = vadd.f32 %v1532, %v1696
      %v1729 = vadd.f32 %v1533, %v1697
      %v1730 = vadd.f32 %v1534, %v1698
      %v1731 = vadd.f32 %v1535, %v1699
      %v1732 = vadd.f32 %v1536, %v1700
      %v1733 = vadd.f32 %v1537, %v1701
      %v1734 = vadd.f32 %v1538, %v1702
      %v1735 = vadd.f32 %v1539, %v1703
      %v1736 = vadd.f32 %v1540, %v1704
      %v1737 = vadd.f32 %v1541, %v1705
      %v1738 = vadd.f32 %v1542, %v1706
      %v1739 = vadd.f32 %v1543, %v1707
      %v1740 = vadd.f32 %v1544, %v1708
      %v1741 = vadd.f32 %v1545, %v1709
      %v1742 = vadd.f32 %v1546, %v1710
      %v1743 = vadd.f32 %v1547, %v1711
      %v1744 = vadd.f32 %v1548, %v1712
      %v1745 = vadd.f32 %v1549, %v1713
      %v1746 = vadd.f32 %v1550, %v1714
      %v1747 = vadd.f32 %v1551, %v1715
      %v1748 = vadd.f32 %v1552, %v1716
      %v1749 = vadd.f32 %v1553, %v1717
      %v1750 = vadd.f32 %v1554, %v1718
      %v1751 = vadd.f32 %v1555, %v1719
      %v1752 = vadd.f32 %v1556, %v1720
      %v1753 = vadd.f32 %v1557, %v1721
      %v1754 = vadd.f32 %v1558, %v1722
      %v1755 = vadd.f32 %v1559, %v1723
      %v1756 = vadd.f32 %v1560, %v1724
      %v1757 = vadd.f32 %v1561, %v1725
      %v1758 = vld [vmem:[%s4] sm:$0x1]
      %v1760 = vlaneseq
      %v1761 = vshrl.u32 %v1760, 7
      %v1762 = vsub.s32 0, %v1761
      %v1763 = vrot.slane %v1758, %v1762
      %v1765 = vadd.f32 %v1726, %v1763
      %v1766 = vadd.f32 %v1727, %v1763
      %v1767 = vadd.f32 %v1728, %v1763
      %v1768 = vadd.f32 %v1729, %v1763
      %v1769 = vadd.f32 %v1730, %v1763
      %v1770 = vadd.f32 %v1731, %v1763
      %v1771 = vadd.f32 %v1732, %v1763
      %v1772 = vadd.f32 %v1733, %v1763
      %v1773 = vadd.f32 %v1734, %v1763
      %v1774 = vadd.f32 %v1735, %v1763
      %v1775 = vadd.f32 %v1736, %v1763
      %v1776 = vadd.f32 %v1737, %v1763
      %v1777 = vadd.f32 %v1738, %v1763
      %v1778 = vadd.f32 %v1739, %v1763
      %v1779 = vadd.f32 %v1740, %v1763
      %v1780 = vadd.f32 %v1741, %v1763
      %v1781 = vadd.f32 %v1742, %v1763
      %v1782 = vadd.f32 %v1743, %v1763
      %v1783 = vadd.f32 %v1744, %v1763
      %v1784 = vadd.f32 %v1745, %v1763
      %v1785 = vadd.f32 %v1746, %v1763
      %v1786 = vadd.f32 %v1747, %v1763
      %v1787 = vadd.f32 %v1748, %v1763
      %v1788 = vadd.f32 %v1749, %v1763
      %v1789 = vadd.f32 %v1750, %v1763
      %v1790 = vadd.f32 %v1751, %v1763
      %v1791 = vadd.f32 %v1752, %v1763
      %v1792 = vadd.f32 %v1753, %v1763
      %v1793 = vadd.f32 %v1754, %v1763
      %v1794 = vadd.f32 %v1755, %v1763
      %v1795 = vadd.f32 %v1756, %v1763
      %v1796 = vadd.f32 %v1757, %v1763
      %v1797 = vmax.f32 %v1765, 0.0
      %v1798 = vmax.f32 %v1766, 0.0
      %v1799 = vmax.f32 %v1767, 0.0
      %v1800 = vmax.f32 %v1768, 0.0
      %v1801 = vmax.f32 %v1769, 0.0
      %v1802 = vmax.f32 %v1770, 0.0
      %v1803 = vmax.f32 %v1771, 0.0
      %v1804 = vmax.f32 %v1772, 0.0
      %v1805 = vmax.f32 %v1773, 0.0
      %v1806 = vmax.f32 %v1774, 0.0
      %v1807 = vmax.f32 %v1775, 0.0
      %v1808 = vmax.f32 %v1776, 0.0
      %v1809 = vmax.f32 %v1777, 0.0
      %v1810 = vmax.f32 %v1778, 0.0
      %v1811 = vmax.f32 %v1779, 0.0
      %v1812 = vmax.f32 %v1780, 0.0
      %v1813 = vmax.f32 %v1781, 0.0
      %v1814 = vmax.f32 %v1782, 0.0
      %v1815 = vmax.f32 %v1783, 0.0
      %v1816 = vmax.f32 %v1784, 0.0
      %v1817 = vmax.f32 %v1785, 0.0
      %v1818 = vmax.f32 %v1786, 0.0
      %v1819 = vmax.f32 %v1787, 0.0
      %v1820 = vmax.f32 %v1788, 0.0
      %v1821 = vmax.f32 %v1789, 0.0
      %v1822 = vmax.f32 %v1790, 0.0
      %v1823 = vmax.f32 %v1791, 0.0
      %v1824 = vmax.f32 %v1792, 0.0
      %v1825 = vmax.f32 %v1793, 0.0
      %v1826 = vmax.f32 %v1794, 0.0
      %v1827 = vmax.f32 %v1795, 0.0
      %v1828 = vmax.f32 %v1796, 0.0
      %1829 = vst [vmem:[%s224] sm:$0xff] %v1797
      %1830 = vst [vmem:[%s224 + $0x8] sm:$0xff] %v1798
      %1831 = vst [vmem:[%s224 + $0x10] sm:$0xff] %v1799
      %1832 = vst [vmem:[%s224 + $0x18] sm:$0xff] %v1800
      %1833 = vst [vmem:[%s224 + $0x20] sm:$0xff] %v1801
      %1834 = vst [vmem:[%s224 + $0x28] sm:$0xff] %v1802
      %1835 = vst [vmem:[%s224 + $0x30] sm:$0xff] %v1803
      %1836 = vst [vmem:[%s224 + $0x38] sm:$0xff] %v1804
      %1837 = vst [vmem:[%s224 + $0x40] sm:$0xff] %v1805
      %1838 = vst [vmem:[%s224 + $0x48] sm:$0xff] %v1806
      %1839 = vst [vmem:[%s224 + $0x50] sm:$0xff] %v1807
      %1840 = vst [vmem:[%s224 + $0x58] sm:$0xff] %v1808
      %1841 = vst [vmem:[%s224 + $0x60] sm:$0xff] %v1809
      %1842 = vst [vmem:[%s224 + $0x68] sm:$0xff] %v1810
      %1843 = vst [vmem:[%s224 + $0x70] sm:$0xff] %v1811
      %1844 = vst [vmem:[%s224 + $0x78] sm:$0xff] %v1812
      %1845 = vst [vmem:[%s224 + $0x80] sm:$0xff] %v1813
      %1846 = vst [vmem:[%s224 + $0x88] sm:$0xff] %v1814
      %1847 = vst [vmem:[%s224 + $0x90] sm:$0xff] %v1815
      %1848 = vst [vmem:[%s224 + $0x98] sm:$0xff] %v1816
      %1849 = vst [vmem:[%s224 + $0xa0] sm:$0xff] %v1817
      %1850 = vst [vmem:[%s224 + $0xa8] sm:$0xff] %v1818
      %1851 = vst [vmem:[%s224 + $0xb0] sm:$0xff] %v1819
      %1852 = vst [vmem:[%s224 + $0xb8] sm:$0xff] %v1820
      %1853 = vst [vmem:[%s224 + $0xc0] sm:$0xff] %v1821
      %1854 = vst [vmem:[%s224 + $0xc8] sm:$0xff] %v1822
      %1855 = vst [vmem:[%s224 + $0xd0] sm:$0xff] %v1823
      %1856 = vst [vmem:[%s224 + $0xd8] sm:$0xff] %v1824
      %1857 = vst [vmem:[%s224 + $0xe0] sm:$0xff] %v1825
      %1858 = vst [vmem:[%s224 + $0xe8] sm:$0xff] %v1826
      %1859 = vst [vmem:[%s224 + $0xf0] sm:$0xff] %v1827
      %1860 = vst [vmem:[%s224 + $0xf8] sm:$0xff] %v1828
      %p1861 = scmp.lt.s32.totalorder %s16, 1
      %s1862 = scalar_select %p1861, %s16, 1
      %s1863 = smul.addr %s1862, 32
      %s1864 = smul.addr %s1863, 8
      %s1865 = scalar_lea.vmem %s5, %s1864
      // Predicated region
      $region41: #{_lambda_.1} parent=39 // pred_check
        %p1866 = pneg %p144
      $region42: #{_lambda_.1} parent=39 // pred_check_branch
        %1868 = sbr.rel (%p1866) target = $region44
      $region43: #{_lambda_.1} parent=39 // pred_region
        _
      $region44: #{_lambda_.1} parent=39 // pred_fallthru
        _
    $region40: #{_lambda_.1} parent=5 // pred_fallthru
      _
    %p1869 = scmp.le.s32.totalorder 2, %s11
    // Predicated region
    $region45: #{_lambda_.1} parent=5 // pred_check
      %p1870 = pneg %p1869
    $region46: #{_lambda_.1} parent=5 // pred_check_branch
      %1872 = sbr.rel (%p1870) target = $region48
    $region47: #{_lambda_.1} parent=5 // pred_region
      %s1873 = ssub.s32 %s11, 2
      // Predicated region
      $region49: #{_lambda_.1} parent=47 // pred_check
        %p1874 = pneg %p150
      $region50: #{_lambda_.1} parent=47 // pred_check_branch
        %1876 = sbr.rel (%p1874) target = $region52
      $region51: #{_lambda_.1} parent=47 // pred_region
        %p1877 = scmp.lt.s32.totalorder %s17, 1
        %s1878 = scalar_select %p1877, %s17, 1
        %s1879 = smul.addr %s1878, 32
        %s1880 = smul.addr %s1879, 8
        %s1881 = scalar_lea.vmem %s5, %s1880
      $region52: #{_lambda_.1} parent=47 // pred_fallthru
        _
    $region48: #{_lambda_.1} parent=5 // pred_fallthru
      _
  $region6: #{_lambda_.1} parent=0 // loop_footer
    %s15 = sadd.s32 1, %s11
  $region7: #{_lambda_.1} parent=0 // loop_footer_branch
    %10 = sbr.rel target = $region3
  $region8: #{_lambda_.1} parent=0 // loop_exit
    _

</llo_original>
